<compile_context>
chip_gen: v7x
topology: tpu7x:2x2x1
jax: 0.10.0
libtpu: 0.0.40
codegen_flags: <defaults>
</compile_context>

<pallas_src>
import math

import jax
import jax.numpy as jnp
from jax.experimental import pallas as pl
from jax.experimental.pallas import tpu as pltpu

LANE = 128


def _round_up(v, m):
    return ((v + m - 1) // m) * m


def _vmem_limit_bytes():
    # Generation-aware cap: ~75% of physical VMEM (~96 MiB on v5e/v6e, ~48 MiB on v7x).
    try:
        cap = getattr(pltpu.get_tpu_info(), "vmem_capacity_bytes", None)
        if cap:
            return int(cap) * 3 // 4
    except Exception:
        pass
    return 48 * 1024 * 1024


# ----------------------------------------------------------------------------
# Pallas kernels
# ----------------------------------------------------------------------------
def _conv1_proj_kernel(a_ref, xk_ref, xr_ref, dinv_ref,
                       w1l_ref, w1r_ref, b1_ref, w2l_ref, w2r_ref, b2_ref,
                       p_ref, q_ref, acc_ref):
    """K-tiled fused conv1 + conv2 linear parts.

    Per (i, k): acc += A[i,k] @ X[k]   (int8 edge counts cast to bf16, f32 accumulate)
    At last k : agg = acc * dinv[i]
                h   = relu(agg @ W1l + Xr[i] @ W1r + b1)     (dropout eval = identity)
                P[i] = h @ W2l ;  Q[i] = h @ W2r + b2
    """
    k = pl.program_id(1)

    @pl.when(k == 0)
    def _():
        acc_ref[...] = jnp.zeros_like(acc_ref)

    acc_ref[...] += jnp.dot(a_ref[...].astype(jnp.bfloat16), xk_ref[...],
                            preferred_element_type=jnp.float32)

    @pl.when(k == pl.num_programs(1) - 1)
    def _():
        agg = (acc_ref[...] * dinv_ref[...]).astype(jnp.bfloat16)
        h = (jnp.dot(agg, w1l_ref[...], preferred_element_type=jnp.float32)
             + jnp.dot(xr_ref[...], w1r_ref[...], preferred_element_type=jnp.float32)
             + b1_ref[...])
        h = jnp.maximum(h, 0.0)
        hb = h.astype(jnp.bfloat16)
        p_ref[...] = jnp.dot(hb, w2l_ref[...],
                             preferred_element_type=jnp.float32).astype(p_ref.dtype)
        q_ref[...] = (jnp.dot(hb, w2r_ref[...], preferred_element_type=jnp.float32)
                      + b2_ref[...]).astype(q_ref.dtype)


def _conv2_agg_kernel(a_ref, pk_ref, q_ref, dinv_ref, z_ref, acc_ref):
    """K-tiled: z[i] = dinv[i] * sum_k A[i,k] @ P[k] + Q[i]."""
    k = pl.program_id(1)

    @pl.when(k == 0)
    def _():
        acc_ref[...] = jnp.zeros_like(acc_ref)

    acc_ref[...] += jnp.dot(a_ref[...].astype(jnp.bfloat16), pk_ref[...],
                            preferred_element_type=jnp.float32)

    @pl.when(k == pl.num_programs(1) - 1)
    def _():
        z = acc_ref[...] * dinv_ref[...] + q_ref[...].astype(jnp.float32)
        z_ref[...] = z.astype(z_ref.dtype)


def _link_pred_kernel(zs_ref, zd_ref, w1s_ref, w1d_ref, b1_ref, w2_ref, b2_ref, o_ref):
    """scores = W2 @ relu(z_src @ W1s^T + z_dst @ W1d^T + b1)^T + b2  -> (1, TE)."""
    h = (jnp.dot(zs_ref[...], w1s_ref[...], preferred_element_type=jnp.float32)
         + jnp.dot(zd_ref[...], w1d_ref[...], preferred_element_type=jnp.float32)
         + b1_ref[...])
    h = jnp.maximum(h, 0.0)
    scores = jax.lax.dot_general(w2_ref[...], h, (((1,), (1,)), ((), ())),
                                 preferred_element_type=jnp.float32)
    o_ref[...] = (scores + b2_ref[...]).astype(o_ref.dtype)


# ----------------------------------------------------------------------------
# Pallas wrappers
# ----------------------------------------------------------------------------
def sage_encode(a_i8, x_bf, inv_deg, pp, *, tile_m, tile_k):
    """Two-layer SAGE encoder. a_i8: (N_pad, N_pad) int8 counts, x_bf: (N_pad, Cin_pad) bf16."""
    n_pad = a_i8.shape[0]
    cin = x_bf.shape[1]
    ch = pp["w1l_t"].shape[1]
    cout = pp["w2l_t"].shape[1]
    assert n_pad % tile_m == 0 and n_pad % tile_k == 0
    grid = (n_pad // tile_m, n_pad // tile_k)

    def resident(shape):
        return pl.BlockSpec(shape, lambda i, k: (0, 0))

    def row_tile(c):
        return pl.BlockSpec((tile_m, c), lambda i, k: (i, 0))

    a_spec = pl.BlockSpec((tile_m, tile_k), lambda i, k: (i, k))
    dinv_spec = pl.BlockSpec((tile_m, 1), lambda i, k: (i, 0))

    cparams = pltpu.CompilerParams(
        dimension_semantics=("parallel", "arbitrary"),
        vmem_limit_bytes=_vmem_limit_bytes(),
    )

    p, q = pl.pallas_call(
        _conv1_proj_kernel,
        grid=grid,
        in_specs=[
            a_spec,                                            # A (TM, TK) int8 counts
            pl.BlockSpec((tile_k, cin), lambda i, k: (k, 0)),  # X K-tile (aggregation)
            row_tile(cin),                                     # X row tile (root/self)
            dinv_spec,                                         # 1/deg per row, f32
            resident((cin, ch)), resident((cin, ch)), resident((1, ch)),
            resident((ch, cout)), resident((ch, cout)), resident((1, cout)),
        ],
        out_specs=(row_tile(cout), row_tile(cout)),
        out_shape=(jax.ShapeDtypeStruct((n_pad, cout), jnp.bfloat16),   # P = h @ W2l^T
                   jax.ShapeDtypeStruct((n_pad, cout), jnp.bfloat16)),  # Q = h @ W2r^T + b2
        scratch_shapes=[pltpu.VMEM((tile_m, cin), jnp.float32)],
        compiler_params=cparams,
    )(a_i8, x_bf, x_bf, inv_deg,
      pp["w1l_t"], pp["w1r_t"], pp["b1"], pp["w2l_t"], pp["w2r_t"], pp["b2"])

    z = pl.pallas_call(
        _conv2_agg_kernel,
        grid=grid,
        in_specs=[
            a_spec,
            pl.BlockSpec((tile_k, cout), lambda i, k: (k, 0)),  # P K-tile
            row_tile(cout),                                     # Q row tile
            dinv_spec,
        ],
        out_specs=row_tile(cout),
        out_shape=jax.ShapeDtypeStruct((n_pad, cout), jnp.bfloat16),
        scratch_shapes=[pltpu.VMEM((tile_m, cout), jnp.float32)],
        compiler_params=cparams,
    )(a_i8, p, q, inv_deg)
    return z


def link_predict(z, src_idx, dst_idx, pp, *, tile_e):
    """Scores for a batch of edges. z: (N_pad, Cout_pad) bf16. Returns (E,) f32."""
    e = src_idx.shape[0]
    cout = z.shape[1]
    ch = pp["lp_w1s_t"].shape[1]
    te = min(tile_e, _round_up(e, LANE))
    e_pad = _round_up(e, te)

    src_p = jnp.zeros((e_pad,), jnp.int32).at[:e].set(src_idx.astype(jnp.int32))
    dst_p = jnp.zeros((e_pad,), jnp.int32).at[:e].set(dst_idx.astype(jnp.int32))
    # TODO(synk): fold this endpoint gather into the kernel (scalar-prefetch indices +
    # DMA gather) to avoid materializing z_src/z_dst in HBM for very large edge batches.
    zs = jnp.take(z, src_p, axis=0)
    zd = jnp.take(z, dst_p, axis=0)

    def resident(shape):
        return pl.BlockSpec(shape, lambda i: (0, 0))

    scores = pl.pallas_call(
        _link_pred_kernel,
        grid=(e_pad // te,),
        in_specs=[
            pl.BlockSpec((te, cout), lambda i: (i, 0)),
            pl.BlockSpec((te, cout), lambda i: (i, 0)),
            resident((cout, ch)), resident((cout, ch)), resident((1, ch)),
            resident((1, ch)), resident((1, 1)),
        ],
        out_specs=pl.BlockSpec((1, te), lambda i: (0, i)),   # lane-dense score row
        out_shape=jax.ShapeDtypeStruct((1, e_pad), jnp.float32),
        compiler_params=pltpu.CompilerParams(
            dimension_semantics=("parallel",),
            vmem_limit_bytes=_vmem_limit_bytes(),
        ),
    )(zs, zd, pp["lp_w1s_t"], pp["lp_w1d_t"], pp["lp_b1"], pp["lp_w2"], pp["lp_b2"])
    return scores[0, :e]  # matches .squeeze() in the PyTorch module


# ----------------------------------------------------------------------------
# Glue: adjacency, parameter init / host-side prep (pre-transpose, pad, cast)
# ----------------------------------------------------------------------------
def build_count_adjacency(edge_index, n_pad):
    # Messages flow edge_index[0] (src) -> edge_index[1] (dst). A holds per-(dst, src)
    # edge counts (exact in int8 / bf16); the mean 1/deg factor stays f32 in-kernel.
    # TODO(synk): int8 overflows if any single (dst, src) pair repeats > 127 times.
    src, dst = edge_index[0], edge_index[1]
    counts = jnp.zeros((n_pad, n_pad), jnp.int32).at[dst, src].add(1)
    deg = jnp.sum(counts, axis=1, keepdims=True).astype(jnp.float32)
    inv_deg = 1.0 / jnp.maximum(deg, 1.0)
    return counts.astype(jnp.int8), inv_deg


def _linear_init(key, out_f, in_f, with_bias=True):
    # PyTorch nn.Linear default init: U(-1/sqrt(fan_in), 1/sqrt(fan_in)).
    kw, kb = jax.random.split(key)
    bound = 1.0 / jnp.sqrt(jnp.float32(in_f))
    w = jax.random.uniform(kw, (out_f, in_f), jnp.float32, -bound, bound)
    b = jax.random.uniform(kb, (out_f,), jnp.float32, -bound, bound) if with_bias else None
    return w, b


def init_params(key, in_channels, hidden_channels, out_channels):
    k1, k2, k3, k4, k5, k6 = jax.random.split(key, 6)
    w1_l, b1_l = _linear_init(k1, hidden_channels, in_channels)          # SAGEConv1 lin_l
    w1_r, _ = _linear_init(k2, hidden_channels, in_channels, False)      # SAGEConv1 lin_r
    w2_l, b2_l = _linear_init(k3, out_channels, hidden_channels)         # SAGEConv2 lin_l
    w2_r, _ = _linear_init(k4, out_channels, hidden_channels, False)     # SAGEConv2 lin_r
    lp_w1, lp_b1 = _linear_init(k5, hidden_channels, out_channels * 2)   # MLP layer 1
    lp_w2, lp_b2 = _linear_init(k6, 1, hidden_channels)                  # MLP layer 2
    return dict(w1_l=w1_l, b1_l=b1_l, w1_r=w1_r, w2_l=w2_l, b2_l=b2_l, w2_r=w2_r,
                lp_w1=lp_w1, lp_b1=lp_b1, lp_w2=lp_w2, lp_b2=lp_b2)


def prepare_params(params, in_channels, hidden_channels, out_channels):
    """One-time host-side prep: transpose to (in, out), zero-pad dims to 128, cast bf16."""
    cin_p = _round_up(in_channels, LANE)
    ch_p = _round_up(hidden_channels, LANE)
    cout_p = _round_up(out_channels, LANE)

    def pad_wT(w, rows_p, cols_p, dtype=jnp.bfloat16):
        wt = w.T  # (in, out)
        out = jnp.zeros((rows_p, cols_p), jnp.float32)
        out = out.at[: wt.shape[0], : wt.shape[1]].set(wt)
        return out.astype(dtype)

    def pad_b(b, cols_p):
        return jnp.zeros((1, cols_p), jnp.float32).at[0, : b.shape[0]].set(b)

    lp_w1_src = params["lp_w1"][:, :out_channels]
    lp_w1_dst = params["lp_w1"][:, out_channels:]
    return dict(
        w1l_t=pad_wT(params["w1_l"], cin_p, ch_p),
        w1r_t=pad_wT(params["w1_r"], cin_p, ch_p),
        b1=pad_b(params["b1_l"], ch_p),
        w2l_t=pad_wT(params["w2_l"], ch_p, cout_p),
        w2r_t=pad_wT(params["w2_r"], ch_p, cout_p),
        b2=pad_b(params["b2_l"], cout_p),
        lp_w1s_t=pad_wT(lp_w1_src, cout_p, ch_p),
        lp_w1d_t=pad_wT(lp_w1_dst, cout_p, ch_p),
        lp_b1=pad_b(params["lp_b1"], ch_p),
        lp_w2=pad_b(params["lp_w2"][0], ch_p),                       # (1, ch_p) f32
        lp_b2=params["lp_b2"].reshape(1, 1).astype(jnp.float32),     # (1, 1) f32
    )


def graphsage_link_predictor(pp, x, edge_index, pos_edge_index, neg_edge_index,
                             *, tile_m=256, tile_k=512, tile_e=512):
    n, cin = x.shape
    cin_pad = pp["w1l_t"].shape[0]

    # Pad N to 128 (lane-dense A) independently of the tile choice, then to the tiles.
    n_pad0 = _round_up(n, LANE)
    tm = min(tile_m, n_pad0)
    tk = min(tile_k, n_pad0)
    n_pad = _round_up(n_pad0, math.lcm(tm, tk))

    a_i8, inv_deg = build_count_adjacency(edge_index, n_pad)
    x_p = (jnp.zeros((n_pad, cin_pad), jnp.float32).at[:n, :cin].set(x)
           .astype(jnp.bfloat16))

    z = sage_encode(a_i8, x_p, inv_deg, pp, tile_m=tm, tile_k=tk)

    # Batch pos + neg edges into a single link-predictor call, then split.
    num_pos = pos_edge_index.shape[1]
    eidx = jnp.concatenate([pos_edge_index, neg_edge_index], axis=1)
    scores = link_predict(z, eidx[0], eidx[1], pp, tile_e=tile_e)
    return scores[:num_pos], scores[num_pos:]


# ----------------------------------------------------------------------------
if __name__ == "__main__":
    key = jax.random.PRNGKey(0)
    k_x, k_e, k_pos, k_neg, k_params = jax.random.split(key, 5)

    num_nodes = 48
    in_channels, hidden_channels, out_channels = 8, 16, 8
    num_edges, num_pos, num_neg = 96, 12, 12

    x = jax.random.normal(k_x, (num_nodes, in_channels), jnp.float32)
    edge_index = jax.random.randint(k_e, (2, num_edges), 0, num_nodes, jnp.int32)
    pos_edge_index = jax.random.randint(k_pos, (2, num_pos), 0, num_nodes, jnp.int32)
    neg_edge_index = jax.random.randint(k_neg, (2, num_neg), 0, num_nodes, jnp.int32)

    params = init_params(k_params, in_channels, hidden_channels, out_channels)
    pp = prepare_params(params, in_channels, hidden_channels, out_channels)

    fwd = jax.jit(graphsage_link_predictor,
                  static_argnames=("tile_m", "tile_k", "tile_e"))
    pos_pred, neg_pred = fwd(pp, x, edge_index, pos_edge_index, neg_edge_index)
    jax.block_until_ready((pos_pred, neg_pred))

    assert pos_pred.shape == (num_pos,), pos_pred.shape
    assert neg_pred.shape == (num_neg,), neg_pred.shape
    print("KERNEL_OK")
</pallas_src>

<mosaic_0001>
module attributes {stable_mosaic.version = 11 : i64} {
  func.func private @main(%arg0: i32) attributes {dimension_semantics = [#tpu.dimension_semantics<core_parallel>], iteration_bounds = array<i64: 2>, tpu.core_type = #tpu.core_type<sc_scalar_subcore>, window_params = []} {
    return
  }
}

module attributes {stable_mosaic.version = 11 : i64} {
  func.func private @main(%arg0: i32) attributes {dimension_semantics = [#tpu.dimension_semantics<core_parallel>], iteration_bounds = array<i64: 2>, tpu.core_type = #tpu.core_type<sc_scalar_subcore>, window_params = []} {
    return
  }
}

module attributes {stable_mosaic.version = 11 : i64} {
  func.func @_conv2_agg_kernel(%arg0: i32, %arg1: i32, %arg2: memref<128x128xi8, #tpu.memory_space<vmem>>, %arg3: memref<128x128xbf16, #tpu.memory_space<vmem>>, %arg4: memref<128x128xbf16, #tpu.memory_space<vmem>>, %arg5: memref<128x1xf32, #tpu.memory_space<vmem>>, %arg6: memref<128x128xbf16, #tpu.memory_space<vmem>>, %arg7: memref<128x128xf32, #tpu.memory_space<vmem>>) attributes {dimension_semantics = [#tpu.dimension_semantics<parallel>, #tpu.dimension_semantics<arbitrary>], iteration_bounds = array<i64: 1, 1>, scalar_prefetch = 0 : i64, scratch_operands = 1 : i64, tpu.core_type = #tpu.core_type<tc>, window_params = [{transform_indices = @transform_0, window_bounds = array<i64: 128, 128>}, {transform_indices = @transform_1, window_bounds = array<i64: 128, 128>}, {transform_indices = @transform_2, window_bounds = array<i64: 128, 128>}, {transform_indices = @transform_3, window_bounds = array<i64: 128, 1>}, {transform_indices = @transform_4, window_bounds = array<i64: 128, 128>}]} {
    %c0_i32 = arith.constant 0 : i32
    %0 = arith.cmpi eq, %arg1, %c0_i32 : i32
    %1 = arith.extui %0 : i1 to i32
    %c0_i32_0 = arith.constant 0 : i32
    %2 = arith.cmpi ne, %1, %c0_i32_0 : i32
    scf.if %2 {
      %cst_10 = arith.constant 0.000000e+00 : f32
      %13 = vector.broadcast %cst_10 : f32 to vector<128x128xf32>
      %c0_11 = arith.constant 0 : index
      %c0_12 = arith.constant 0 : index
      %14 = vector.load %arg7[%c0_11, %c0_12] : memref<128x128xf32, #tpu.memory_space<vmem>>, vector<128x128xf32>
      tpu.vector_store %arg7[%c0_11, %c0_12], %13 {strides = array<i32>} : memref<128x128xf32, #tpu.memory_space<vmem>>, vector<128x128xf32>,
    } else {
    }
    %c0 = arith.constant 0 : index
    %c0_1 = arith.constant 0 : index
    %3 = vector.load %arg7[%c0, %c0_1] : memref<128x128xf32, #tpu.memory_space<vmem>>, vector<128x128xf32>
    %c0_2 = arith.constant 0 : index
    %c0_3 = arith.constant 0 : index
    %4 = vector.load %arg2[%c0_2, %c0_3] : memref<128x128xi8, #tpu.memory_space<vmem>>, vector<128x128xi8>
    %5 = arith.sitofp %4 : vector<128x128xi8> to vector<128x128xbf16>
    %c0_4 = arith.constant 0 : index
    %c0_5 = arith.constant 0 : index
    %6 = vector.load %arg3[%c0_4, %c0_5] : memref<128x128xbf16, #tpu.memory_space<vmem>>, vector<128x128xbf16>
    %cst = arith.constant dense<0.000000e+00> : vector<128x128xf32>
    %7 = tpu.matmul %5, %6, %cst {dimension_numbers = #tpu.dot_dimension_numbers<[1], [0], [0], [1], [0, 0, 1, 1], [], []>} : vector<128x128xbf16>, vector<128x128xbf16>, vector<128x128xf32> -> vector<128x128xf32>
    %8 = arith.addf %3, %7 : vector<128x128xf32>
    %c0_6 = arith.constant 0 : index
    %c0_7 = arith.constant 0 : index
    %9 = vector.load %arg7[%c0_6, %c0_7] : memref<128x128xf32, #tpu.memory_space<vmem>>, vector<128x128xf32>
    tpu.vector_store %arg7[%c0_6, %c0_7], %8 {strides = array<i32>} : memref<128x128xf32, #tpu.memory_space<vmem>>, vector<128x128xf32>,
    %c0_i32_8 = arith.constant 0 : i32
    %10 = arith.cmpi eq, %arg1, %c0_i32_8 : i32
    %11 = arith.extui %10 : i1 to i32
    %c0_i32_9 = arith.constant 0 : i32
    %12 = arith.cmpi ne, %11, %c0_i32_9 : i32
    scf.if %12 {
      %c0_10 = arith.constant 0 : index
      %c0_11 = arith.constant 0 : index
      %13 = vector.load %arg7[%c0_10, %c0_11] : memref<128x128xf32, #tpu.memory_space<vmem>>, vector<128x128xf32>
      %c0_12 = arith.constant 0 : index
      %c0_13 = arith.constant 0 : index
      %14 = vector.load %arg5[%c0_12, %c0_13] : memref<128x1xf32, #tpu.memory_space<vmem>>, vector<128x1xf32>
      %15 = vector.broadcast %14 : vector<128x1xf32> to vector<128x128xf32>
      %16 = arith.mulf %13, %15 : vector<128x128xf32>
      %c0_14 = arith.constant 0 : index
      %c0_15 = arith.constant 0 : index
      %17 = vector.load %arg4[%c0_14, %c0_15] : memref<128x128xbf16, #tpu.memory_space<vmem>>, vector<128x128xbf16>
      %18 = arith.extf %17 : vector<128x128xbf16> to vector<128x128xf32>
      %19 = arith.addf %16, %18 : vector<128x128xf32>
      %20 = arith.truncf %19 : vector<128x128xf32> to vector<128x128xbf16>
      %c0_16 = arith.constant 0 : index
      %c0_17 = arith.constant 0 : index
      %21 = vector.load %arg6[%c0_16, %c0_17] : memref<128x128xbf16, #tpu.memory_space<vmem>>, vector<128x128xbf16>
      tpu.vector_store %arg6[%c0_16, %c0_17], %20 {strides = array<i32>} : memref<128x128xbf16, #tpu.memory_space<vmem>>, vector<128x128xbf16>,
    } else {
    }
    return
  }
  func.func @transform_0(%arg0: i32, %arg1: i32) -> (i32, i32) {
    %c0_i32 = arith.constant 0 : i32
    return %arg0, %arg1 : i32, i32
  }
  func.func @transform_1(%arg0: i32, %arg1: i32) -> (i32, i32) {
    %c0_i32 = arith.constant 0 : i32
    %c0_i32_0 = arith.constant 0 : i32
    return %arg1, %c0_i32 : i32, i32
  }
  func.func @transform_2(%arg0: i32, %arg1: i32) -> (i32, i32) {
    %c0_i32 = arith.constant 0 : i32
    %c0_i32_0 = arith.constant 0 : i32
    return %arg0, %c0_i32 : i32, i32
  }
  func.func @transform_3(%arg0: i32, %arg1: i32) -> (i32, i32) {
    %c0_i32 = arith.constant 0 : i32
    %c0_i32_0 = arith.constant 0 : i32
    return %arg0, %c0_i32 : i32, i32
  }
  func.func @transform_4(%arg0: i32, %arg1: i32) -> (i32, i32) {
    %c0_i32 = arith.constant 0 : i32
    %c0_i32_0 = arith.constant 0 : i32
    return %arg0, %c0_i32 : i32, i32
  }
}

module attributes {stable_mosaic.version = 11 : i64} {
  func.func @_conv1_proj_kernel(%arg0: i32, %arg1: i32, %arg2: memref<128x128xi8, #tpu.memory_space<vmem>>, %arg3: memref<128x128xbf16, #tpu.memory_space<vmem>>, %arg4: memref<128x128xbf16, #tpu.memory_space<vmem>>, %arg5: memref<128x1xf32, #tpu.memory_space<vmem>>, %arg6: memref<128x128xbf16, #tpu.memory_space<vmem>>, %arg7: memref<128x128xbf16, #tpu.memory_space<vmem>>, %arg8: memref<1x128xf32, #tpu.memory_space<vmem>>, %arg9: memref<128x128xbf16, #tpu.memory_space<vmem>>, %arg10: memref<128x128xbf16, #tpu.memory_space<vmem>>, %arg11: memref<1x128xf32, #tpu.memory_space<vmem>>, %arg12: memref<128x128xbf16, #tpu.memory_space<vmem>>, %arg13: memref<128x128xbf16, #tpu.memory_space<vmem>>, %arg14: memref<128x128xf32, #tpu.memory_space<vmem>>) attributes {dimension_semantics = [#tpu.dimension_semantics<parallel>, #tpu.dimension_semantics<arbitrary>], iteration_bounds = array<i64: 1, 1>, scalar_prefetch = 0 : i64, scratch_operands = 1 : i64, tpu.core_type = #tpu.core_type<tc>, window_params = [{transform_indices = @transform_0, window_bounds = array<i64: 128, 128>}, {transform_indices = @transform_1, window_bounds = array<i64: 128, 128>}, {transform_indices = @transform_2, window_bounds = array<i64: 128, 128>}, {transform_indices = @transform_3, window_bounds = array<i64: 128, 1>}, {pipeline_mode = #tpu.pipeline_mode<synchronous>, transform_indices = @transform_4, window_bounds = array<i64: 128, 128>}, {pipeline_mode = #tpu.pipeline_mode<synchronous>, transform_indices = @transform_5, window_bounds = array<i64: 128, 128>}, {pipeline_mode = #tpu.pipeline_mode<synchronous>, transform_indices = @transform_6, window_bounds = array<i64: 1, 128>}, {pipeline_mode = #tpu.pipeline_mode<synchronous>, transform_indices = @transform_7, window_bounds = array<i64: 128, 128>}, {pipeline_mode = #tpu.pipeline_mode<synchronous>, transform_indices = @transform_8, window_bounds = array<i64: 128, 128>}, {pipeline_mode = #tpu.pipeline_mode<synchronous>, transform_indices = @transform_9, window_bounds = array<i64: 1, 128>}, {transform_indices = @transform_10, window_bounds = array<i64: 128, 128>}, {transform_indices = @transform_11, window_bounds = array<i64: 128, 128>}]} {
    %c0_i32 = arith.constant 0 : i32
    %0 = arith.cmpi eq, %arg1, %c0_i32 : i32
    %1 = arith.extui %0 : i1 to i32
    %c0_i32_0 = arith.constant 0 : i32
    %2 = arith.cmpi ne, %1, %c0_i32_0 : i32
    scf.if %2 {
      %cst_10 = arith.constant 0.000000e+00 : f32
      %13 = vector.broadcast %cst_10 : f32 to vector<128x128xf32>
      %c0_11 = arith.constant 0 : index
      %c0_12 = arith.constant 0 : index
      %14 = vector.load %arg14[%c0_11, %c0_12] : memref<128x128xf32, #tpu.memory_space<vmem>>, vector<128x128xf32>
      tpu.vector_store %arg14[%c0_11, %c0_12], %13 {strides = array<i32>} : memref<128x128xf32, #tpu.memory_space<vmem>>, vector<128x128xf32>,
    } else {
    }
    %c0 = arith.constant 0 : index
    %c0_1 = arith.constant 0 : index
    %3 = vector.load %arg14[%c0, %c0_1] : memref<128x128xf32, #tpu.memory_space<vmem>>, vector<128x128xf32>
    %c0_2 = arith.constant 0 : index
    %c0_3 = arith.constant 0 : index
    %4 = vector.load %arg2[%c0_2, %c0_3] : memref<128x128xi8, #tpu.memory_space<vmem>>, vector<128x128xi8>
    %5 = arith.sitofp %4 : vector<128x128xi8> to vector<128x128xbf16>
    %c0_4 = arith.constant 0 : index
    %c0_5 = arith.constant 0 : index
    %6 = vector.load %arg3[%c0_4, %c0_5] : memref<128x128xbf16, #tpu.memory_space<vmem>>, vector<128x128xbf16>
    %cst = arith.constant dense<0.000000e+00> : vector<128x128xf32>
    %7 = tpu.matmul %5, %6, %cst {dimension_numbers = #tpu.dot_dimension_numbers<[1], [0], [0], [1], [0, 0, 1, 1], [], []>} : vector<128x128xbf16>, vector<128x128xbf16>, vector<128x128xf32> -> vector<128x128xf32>
    %8 = arith.addf %3, %7 : vector<128x128xf32>
    %c0_6 = arith.constant 0 : index
    %c0_7 = arith.constant 0 : index
    %9 = vector.load %arg14[%c0_6, %c0_7] : memref<128x128xf32, #tpu.memory_space<vmem>>, vector<128x128xf32>
    tpu.vector_store %arg14[%c0_6, %c0_7], %8 {strides = array<i32>} : memref<128x128xf32, #tpu.memory_space<vmem>>, vector<128x128xf32>,
    %c0_i32_8 = arith.constant 0 : i32
    %10 = arith.cmpi eq, %arg1, %c0_i32_8 : i32
    %11 = arith.extui %10 : i1 to i32
    %c0_i32_9 = arith.constant 0 : i32
    %12 = arith.cmpi ne, %11, %c0_i32_9 : i32
    scf.if %12 {
      %c0_10 = arith.constant 0 : index
      %c0_11 = arith.constant 0 : index
      %13 = vector.load %arg14[%c0_10, %c0_11] : memref<128x128xf32, #tpu.memory_space<vmem>>, vector<128x128xf32>
      %c0_12 = arith.constant 0 : index
      %c0_13 = arith.constant 0 : index
      %14 = vector.load %arg5[%c0_12, %c0_13] : memref<128x1xf32, #tpu.memory_space<vmem>>, vector<128x1xf32>
      %15 = vector.broadcast %14 : vector<128x1xf32> to vector<128x128xf32>
      %16 = arith.mulf %13, %15 : vector<128x128xf32>
      %17 = arith.truncf %16 : vector<128x128xf32> to vector<128x128xbf16>
      %c0_14 = arith.constant 0 : index
      %c0_15 = arith.constant 0 : index
      %18 = vector.load %arg6[%c0_14, %c0_15] : memref<128x128xbf16, #tpu.memory_space<vmem>>, vector<128x128xbf16>
      %cst_16 = arith.constant dense<0.000000e+00> : vector<128x128xf32>
      %19 = tpu.matmul %17, %18, %cst_16 {dimension_numbers = #tpu.dot_dimension_numbers<[1], [0], [0], [1], [0, 0, 1, 1], [], []>} : vector<128x128xbf16>, vector<128x128xbf16>, vector<128x128xf32> -> vector<128x128xf32>
      %c0_17 = arith.constant 0 : index
      %c0_18 = arith.constant 0 : index
      %20 = vector.load %arg4[%c0_17, %c0_18] : memref<128x128xbf16, #tpu.memory_space<vmem>>, vector<128x128xbf16>
      %c0_19 = arith.constant 0 : index
      %c0_20 = arith.constant 0 : index
      %21 = vector.load %arg7[%c0_19, %c0_20] : memref<128x128xbf16, #tpu.memory_space<vmem>>, vector<128x128xbf16>
      %cst_21 = arith.constant dense<0.000000e+00> : vector<128x128xf32>
      %22 = tpu.matmul %20, %21, %cst_21 {dimension_numbers = #tpu.dot_dimension_numbers<[1], [0], [0], [1], [0, 0, 1, 1], [], []>} : vector<128x128xbf16>, vector<128x128xbf16>, vector<128x128xf32> -> vector<128x128xf32>
      %23 = arith.addf %19, %22 : vector<128x128xf32>
      %c0_22 = arith.constant 0 : index
      %c0_23 = arith.constant 0 : index
      %24 = vector.load %arg8[%c0_22, %c0_23] : memref<1x128xf32, #tpu.memory_space<vmem>>, vector<1x128xf32>
      %25 = vector.broadcast %24 : vector<1x128xf32> to vector<128x128xf32>
      %26 = arith.addf %23, %25 : vector<128x128xf32>
      %cst_24 = arith.constant 0.000000e+00 : f32
      %27 = vector.broadcast %cst_24 : f32 to vector<128x128xf32>
      %28 = arith.maximumf %26, %27 : vector<128x128xf32>
      %29 = arith.truncf %28 : vector<128x128xf32> to vector<128x128xbf16>
      %c0_25 = arith.constant 0 : index
      %c0_26 = arith.constant 0 : index
      %30 = vector.load %arg9[%c0_25, %c0_26] : memref<128x128xbf16, #tpu.memory_space<vmem>>, vector<128x128xbf16>
      %cst_27 = arith.constant dense<0.000000e+00> : vector<128x128xf32>
      %31 = tpu.matmul %29, %30, %cst_27 {dimension_numbers = #tpu.dot_dimension_numbers<[1], [0], [0], [1], [0, 0, 1, 1], [], []>} : vector<128x128xbf16>, vector<128x128xbf16>, vector<128x128xf32> -> vector<128x128xf32>
      %32 = arith.truncf %31 : vector<128x128xf32> to vector<128x128xbf16>
      %c0_28 = arith.constant 0 : index
      %c0_29 = arith.constant 0 : index
      %33 = vector.load %arg12[%c0_28, %c0_29] : memref<128x128xbf16, #tpu.memory_space<vmem>>, vector<128x128xbf16>
      tpu.vector_store %arg12[%c0_28, %c0_29], %32 {strides = array<i32>} : memref<128x128xbf16, #tpu.memory_space<vmem>>, vector<128x128xbf16>,
      %c0_30 = arith.constant 0 : index
      %c0_31 = arith.constant 0 : index
      %34 = vector.load %arg10[%c0_30, %c0_31] : memref<128x128xbf16, #tpu.memory_space<vmem>>, vector<128x128xbf16>
      %cst_32 = arith.constant dense<0.000000e+00> : vector<128x128xf32>
      %35 = tpu.matmul %29, %34, %cst_32 {dimension_numbers = #tpu.dot_dimension_numbers<[1], [0], [0], [1], [0, 0, 1, 1], [], []>} : vector<128x128xbf16>, vector<128x128xbf16>, vector<128x128xf32> -> vector<128x128xf32>
      %c0_33 = arith.constant 0 : index
      %c0_34 = arith.constant 0 : index
      %36 = vector.load %arg11[%c0_33, %c0_34] : memref<1x128xf32, #tpu.memory_space<vmem>>, vector<1x128xf32>
      %37 = vector.broadcast %36 : vector<1x128xf32> to vector<128x128xf32>
      %38 = arith.addf %35, %37 : vector<128x128xf32>
      %39 = arith.truncf %38 : vector<128x128xf32> to vector<128x128xbf16>
      %c0_35 = arith.constant 0 : index
      %c0_36 = arith.constant 0 : index
      %40 = vector.load %arg13[%c0_35, %c0_36] : memref<128x128xbf16, #tpu.memory_space<vmem>>, vector<128x128xbf16>
      tpu.vector_store %arg13[%c0_35, %c0_36], %39 {strides = array<i32>} : memref<128x128xbf16, #tpu.memory_space<vmem>>, vector<128x128xbf16>,
    } else {
    }
    return
  }
  func.func @transform_0(%arg0: i32, %arg1: i32) -> (i32, i32) {
    %c0_i32 = arith.constant 0 : i32
    return %arg0, %arg1 : i32, i32
  }
  func.func @transform_1(%arg0: i32, %arg1: i32) -> (i32, i32) {
    %c0_i32 = arith.constant 0 : i32
    %c0_i32_0 = arith.constant 0 : i32
    return %arg1, %c0_i32 : i32, i32
  }
  func.func @transform_2(%arg0: i32, %arg1: i32) -> (i32, i32) {
    %c0_i32 = arith.constant 0 : i32
    %c0_i32_0 = arith.constant 0 : i32
    return %arg0, %c0_i32 : i32, i32
  }
  func.func @transform_3(%arg0: i32, %arg1: i32) -> (i32, i32) {
    %c0_i32 = arith.constant 0 : i32
    %c0_i32_0 = arith.constant 0 : i32
    return %arg0, %c0_i32 : i32, i32
  }
  func.func @transform_4(%arg0: i32, %arg1: i32) -> (i32, i32) {
    %c0_i32 = arith.constant 0 : i32
    %c0_i32_0 = arith.constant 0 : i32
    %c0_i32_1 = arith.constant 0 : i32
    return %c0_i32, %c0_i32_0 : i32, i32
  }
  func.func @transform_5(%arg0: i32, %arg1: i32) -> (i32, i32) {
    %c0_i32 = arith.constant 0 : i32
    %c0_i32_0 = arith.constant 0 : i32
    %c0_i32_1 = arith.constant 0 : i32
    return %c0_i32, %c0_i32_0 : i32, i32
  }
  func.func @transform_6(%arg0: i32, %arg1: i32) -> (i32, i32) {
    %c0_i32 = arith.constant 0 : i32
    %c0_i32_0 = arith.constant 0 : i32
    %c0_i32_1 = arith.constant 0 : i32
    return %c0_i32, %c0_i32_0 : i32, i32
  }
  func.func @transform_7(%arg0: i32, %arg1: i32) -> (i32, i32) {
    %c0_i32 = arith.constant 0 : i32
    %c0_i32_0 = arith.constant 0 : i32
    %c0_i32_1 = arith.constant 0 : i32
    return %c0_i32, %c0_i32_0 : i32, i32
  }
  func.func @transform_8(%arg0: i32, %arg1: i32) -> (i32, i32) {
    %c0_i32 = arith.constant 0 : i32
    %c0_i32_0 = arith.constant 0 : i32
    %c0_i32_1 = arith.constant 0 : i32
    return %c0_i32, %c0_i32_0 : i32, i32
  }
  func.func @transform_9(%arg0: i32, %arg1: i32) -> (i32, i32) {
    %c0_i32 = arith.constant 0 : i32
    %c0_i32_0 = arith.constant 0 : i32
    %c0_i32_1 = arith.constant 0 : i32
    return %c0_i32, %c0_i32_0 : i32, i32
  }
  func.func @transform_10(%arg0: i32, %arg1: i32) -> (i32, i32) {
    %c0_i32 = arith.constant 0 : i32
    %c0_i32_0 = arith.constant 0 : i32
    return %arg0, %c0_i32 : i32, i32
  }
  func.func @transform_11(%arg0: i32, %arg1: i32) -> (i32, i32) {
    %c0_i32 = arith.constant 0 : i32
    %c0_i32_0 = arith.constant 0 : i32
    return %arg0, %c0_i32 : i32, i32
  }
}

module attributes {stable_mosaic.version = 11 : i64} {
  func.func @_link_pred_kernel(%arg0: i32, %arg1: memref<128x128xbf16, #tpu.memory_space<vmem>>, %arg2: memref<128x128xbf16, #tpu.memory_space<vmem>>, %arg3: memref<128x128xbf16, #tpu.memory_space<vmem>>, %arg4: memref<128x128xbf16, #tpu.memory_space<vmem>>, %arg5: memref<1x128xf32, #tpu.memory_space<vmem>>, %arg6: memref<1x128xf32, #tpu.memory_space<vmem>>, %arg7: memref<1x1xf32, #tpu.memory_space<vmem>>, %arg8: memref<1x128xf32, #tpu.memory_space<vmem>>) attributes {dimension_semantics = [#tpu.dimension_semantics<parallel>], iteration_bounds = array<i64: 1>, scalar_prefetch = 0 : i64, scratch_operands = 0 : i64, tpu.core_type = #tpu.core_type<tc>, window_params = [{transform_indices = @transform_0, window_bounds = array<i64: 128, 128>}, {transform_indices = @transform_1, window_bounds = array<i64: 128, 128>}, {pipeline_mode = #tpu.pipeline_mode<synchronous>, transform_indices = @transform_2, window_bounds = array<i64: 128, 128>}, {pipeline_mode = #tpu.pipeline_mode<synchronous>, transform_indices = @transform_3, window_bounds = array<i64: 128, 128>}, {pipeline_mode = #tpu.pipeline_mode<synchronous>, transform_indices = @transform_4, window_bounds = array<i64: 1, 128>}, {pipeline_mode = #tpu.pipeline_mode<synchronous>, transform_indices = @transform_5, window_bounds = array<i64: 1, 128>}, {pipeline_mode = #tpu.pipeline_mode<synchronous>, transform_indices = @transform_6, window_bounds = array<i64: 1, 1>}, {transform_indices = @transform_7, window_bounds = array<i64: 1, 128>}]} {
    %c0 = arith.constant 0 : index
    %c0_0 = arith.constant 0 : index
    %0 = vector.load %arg1[%c0, %c0_0] : memref<128x128xbf16, #tpu.memory_space<vmem>>, vector<128x128xbf16>
    %c0_1 = arith.constant 0 : index
    %c0_2 = arith.constant 0 : index
    %1 = vector.load %arg3[%c0_1, %c0_2] : memref<128x128xbf16, #tpu.memory_space<vmem>>, vector<128x128xbf16>
    %cst = arith.constant dense<0.000000e+00> : vector<128x128xf32>
    %2 = tpu.matmul %0, %1, %cst {dimension_numbers = #tpu.dot_dimension_numbers<[1], [0], [0], [1], [0, 0, 1, 1], [], []>} : vector<128x128xbf16>, vector<128x128xbf16>, vector<128x128xf32> -> vector<128x128xf32>
    %c0_3 = arith.constant 0 : index
    %c0_4 = arith.constant 0 : index
    %3 = vector.load %arg2[%c0_3, %c0_4] : memref<128x128xbf16, #tpu.memory_space<vmem>>, vector<128x128xbf16>
    %c0_5 = arith.constant 0 : index
    %c0_6 = arith.constant 0 : index
    %4 = vector.load %arg4[%c0_5, %c0_6] : memref<128x128xbf16, #tpu.memory_space<vmem>>, vector<128x128xbf16>
    %cst_7 = arith.constant dense<0.000000e+00> : vector<128x128xf32>
    %5 = tpu.matmul %3, %4, %cst_7 {dimension_numbers = #tpu.dot_dimension_numbers<[1], [0], [0], [1], [0, 0, 1, 1], [], []>} : vector<128x128xbf16>, vector<128x128xbf16>, vector<128x128xf32> -> vector<128x128xf32>
    %6 = arith.addf %2, %5 : vector<128x128xf32>
    %c0_8 = arith.constant 0 : index
    %c0_9 = arith.constant 0 : index
    %7 = vector.load %arg5[%c0_8, %c0_9] : memref<1x128xf32, #tpu.memory_space<vmem>>, vector<1x128xf32>
    %8 = vector.broadcast %7 : vector<1x128xf32> to vector<128x128xf32>
    %9 = arith.addf %6, %8 : vector<128x128xf32>
    %cst_10 = arith.constant 0.000000e+00 : f32
    %10 = vector.broadcast %cst_10 : f32 to vector<128x128xf32>
    %11 = arith.maximumf %9, %10 : vector<128x128xf32>
    %c0_11 = arith.constant 0 : index
    %c0_12 = arith.constant 0 : index
    %12 = vector.load %arg6[%c0_11, %c0_12] : memref<1x128xf32, #tpu.memory_space<vmem>>, vector<1x128xf32>
    %cst_13 = arith.constant dense<0.000000e+00> : vector<1x128xf32>
    %13 = tpu.matmul %12, %11, %cst_13 {dimension_numbers = #tpu.dot_dimension_numbers<[1], [1], [0], [0], [0, 0, 1, 0], [], []>} : vector<1x128xf32>, vector<128x128xf32>, vector<1x128xf32> -> vector<1x128xf32>
    %c0_14 = arith.constant 0 : index
    %c0_15 = arith.constant 0 : index
    %14 = vector.load %arg7[%c0_14, %c0_15] : memref<1x1xf32, #tpu.memory_space<vmem>>, vector<1x1xf32>
    %15 = vector.broadcast %14 : vector<1x1xf32> to vector<1x128xf32>
    %16 = arith.addf %13, %15 : vector<1x128xf32>
    %c0_16 = arith.constant 0 : index
    %c0_17 = arith.constant 0 : index
    %17 = vector.load %arg8[%c0_16, %c0_17] : memref<1x128xf32, #tpu.memory_space<vmem>>, vector<1x128xf32>
    tpu.vector_store %arg8[%c0_16, %c0_17], %16 {strides = array<i32>} : memref<1x128xf32, #tpu.memory_space<vmem>>, vector<1x128xf32>,
    return
  }
  func.func @transform_0(%arg0: i32) -> (i32, i32) {
    %c0_i32 = arith.constant 0 : i32
    %c0_i32_0 = arith.constant 0 : i32
    return %arg0, %c0_i32 : i32, i32
  }
  func.func @transform_1(%arg0: i32) -> (i32, i32) {
    %c0_i32 = arith.constant 0 : i32
    %c0_i32_0 = arith.constant 0 : i32
    return %arg0, %c0_i32 : i32, i32
  }
  func.func @transform_2(%arg0: i32) -> (i32, i32) {
    %c0_i32 = arith.constant 0 : i32
    %c0_i32_0 = arith.constant 0 : i32
    %c0_i32_1 = arith.constant 0 : i32
    return %c0_i32, %c0_i32_0 : i32, i32
  }
  func.func @transform_3(%arg0: i32) -> (i32, i32) {
    %c0_i32 = arith.constant 0 : i32
    %c0_i32_0 = arith.constant 0 : i32
    %c0_i32_1 = arith.constant 0 : i32
    return %c0_i32, %c0_i32_0 : i32, i32
  }
  func.func @transform_4(%arg0: i32) -> (i32, i32) {
    %c0_i32 = arith.constant 0 : i32
    %c0_i32_0 = arith.constant 0 : i32
    %c0_i32_1 = arith.constant 0 : i32
    return %c0_i32, %c0_i32_0 : i32, i32
  }
  func.func @transform_5(%arg0: i32) -> (i32, i32) {
    %c0_i32 = arith.constant 0 : i32
    %c0_i32_0 = arith.constant 0 : i32
    %c0_i32_1 = arith.constant 0 : i32
    return %c0_i32, %c0_i32_0 : i32, i32
  }
  func.func @transform_6(%arg0: i32) -> (i32, i32) {
    %c0_i32 = arith.constant 0 : i32
    %c0_i32_0 = arith.constant 0 : i32
    %c0_i32_1 = arith.constant 0 : i32
    return %c0_i32, %c0_i32_0 : i32, i32
  }
  func.func @transform_7(%arg0: i32) -> (i32, i32) {
    %c0_i32 = arith.constant 0 : i32
    %c0_i32_0 = arith.constant 0 : i32
    return %c0_i32, %arg0 : i32, i32
  }
}

</mosaic_0001>

<llo_original>
// kernel: graphsage_link_predictor.4
$region0: #{graphsage_link_predictor.4}
  #allocation0 [shape = 'u32[]', space=smem, size = 0x4, offset = 0x4, fixed_abs, tag = 'smem constant byte address 0x4 - core index']
  #allocation1 [shape = 'u32[144,128]{1,0:T(1,128)}', space=vmem, size = 0x12000, scoped, tag = 'internal scratch']
  #allocation2 [shape = 'f32[128,128]{1,0:T(8,128)}', space=vmem, size = 0x10000, scoped, tag = 'scratch operand']
  %s0 = inlined_call_operand.vmem [shape: s8[128,128], index: 0, kind: input, shape index: {}]
  %s1 = inlined_call_operand.vmem [shape: bf16[128,128], index: 1, kind: input, shape index: {}]
  %s2 = inlined_call_operand.vmem [shape: bf16[128,128], index: 2, kind: input, shape index: {}]
  %s3 = inlined_call_operand.vmem [shape: f32[128,1], index: 3, kind: input, shape index: {}]
  %s4 = inlined_call_operand.vmem [shape: bf16[128,128], index: 4, kind: output, shape index: {}]
  %s5 = sld [smem:[#allocation0]]
  $region34: #{graphsage_link_predictor.4} parent=0
    _
  %s7 = ssub.s32 1, %s5
  %s8 = scalar_select 0, %s7, %s5
  // Predicated region
  $region2: #{graphsage_link_predictor.4} parent=0 // pred_check
    _
  $region3: #{graphsage_link_predictor.4} parent=0 // pred_check_branch
    %10 = sbr.rel (0) target = $region5
  $region4: #{graphsage_link_predictor.4} parent=0 // pred_region
    _
  $region5: #{graphsage_link_predictor.4} parent=0 // pred_fallthru
    _
  // Predicated region
  $region6: #{graphsage_link_predictor.4} parent=0 // pred_check
    _
  $region7: #{graphsage_link_predictor.4} parent=0 // pred_check_branch
    %12 = sbr.rel (0) target = $region9
  $region8: #{graphsage_link_predictor.4} parent=0 // pred_region
    _
  $region9: #{graphsage_link_predictor.4} parent=0 // pred_fallthru
    _
  // Predicated region
  $region10: #{graphsage_link_predictor.4} parent=0 // pred_check
    _
  $region11: #{graphsage_link_predictor.4} parent=0 // pred_check_branch
    %14 = sbr.rel (0) target = $region13
  $region12: #{graphsage_link_predictor.4} parent=0 // pred_region
    _
  $region13: #{graphsage_link_predictor.4} parent=0 // pred_fallthru
    _
  // Predicated region
  $region14: #{graphsage_link_predictor.4} parent=0 // pred_check
    _
  $region15: #{graphsage_link_predictor.4} parent=0 // pred_check_branch
    %16 = sbr.rel (0) target = $region17
  $region16: #{graphsage_link_predictor.4} parent=0 // pred_region
    _
  $region17: #{graphsage_link_predictor.4} parent=0 // pred_fallthru
    _
  %p18 = scmp.eq.s32.totalorder 0, 0
  // Predicated region
  $region18: #{graphsage_link_predictor.4} parent=0 // pred_check
    %p19 = pneg %p18
  $region19: #{graphsage_link_predictor.4} parent=0 // pred_check_branch
    %21 = sbr.rel (%p19) target = $region21
  $region20: #{graphsage_link_predictor.4} parent=0 // pred_region
    %22 = vst [vmem:[#allocation2] sm:$0xff] 0.0
    %23 = vst [vmem:[#allocation2 + $0x8] sm:$0xff] 0.0
    %24 = vst [vmem:[#allocation2 + $0x10] sm:$0xff] 0.0
    %25 = vst [vmem:[#allocation2 + $0x18] sm:$0xff] 0.0
    %26 = vst [vmem:[#allocation2 + $0x20] sm:$0xff] 0.0
    %27 = vst [vmem:[#allocation2 + $0x28] sm:$0xff] 0.0
    %28 = vst [vmem:[#allocation2 + $0x30] sm:$0xff] 0.0
    %29 = vst [vmem:[#allocation2 + $0x38] sm:$0xff] 0.0
    %30 = vst [vmem:[#allocation2 + $0x40] sm:$0xff] 0.0
    %31 = vst [vmem:[#allocation2 + $0x48] sm:$0xff] 0.0
    %32 = vst [vmem:[#allocation2 + $0x50] sm:$0xff] 0.0
    %33 = vst [vmem:[#allocation2 + $0x58] sm:$0xff] 0.0
    %34 = vst [vmem:[#allocation2 + $0x60] sm:$0xff] 0.0
    %35 = vst [vmem:[#allocation2 + $0x68] sm:$0xff] 0.0
    %36 = vst [vmem:[#allocation2 + $0x70] sm:$0xff] 0.0
    %37 = vst [vmem:[#allocation2 + $0x78] sm:$0xff] 0.0
  $region21: #{graphsage_link_predictor.4} parent=0 // pred_fallthru
    _
  %v38 = vld [vmem:[#allocation2] sm:$0xff]
  %v39 = vld [vmem:[#allocation2 + $0x8] sm:$0xff]
  %v40 = vld [vmem:[#allocation2 + $0x10] sm:$0xff]
  %v41 = vld [vmem:[#allocation2 + $0x18] sm:$0xff]
  %v42 = vld [vmem:[#allocation2 + $0x20] sm:$0xff]
  %v43 = vld [vmem:[#allocation2 + $0x28] sm:$0xff]
  %v44 = vld [vmem:[#allocation2 + $0x30] sm:$0xff]
  %v45 = vld [vmem:[#allocation2 + $0x38] sm:$0xff]
  %v46 = vld [vmem:[#allocation2 + $0x40] sm:$0xff]
  %v47 = vld [vmem:[#allocation2 + $0x48] sm:$0xff]
  %v48 = vld [vmem:[#allocation2 + $0x50] sm:$0xff]
  %v49 = vld [vmem:[#allocation2 + $0x58] sm:$0xff]
  %v50 = vld [vmem:[#allocation2 + $0x60] sm:$0xff]
  %v51 = vld [vmem:[#allocation2 + $0x68] sm:$0xff]
  %v52 = vld [vmem:[#allocation2 + $0x70] sm:$0xff]
  %v53 = vld [vmem:[#allocation2 + $0x78] sm:$0xff]
  %v54 = vld [vmem:[%s0] sm:$0xff]
  %v55 = vld [vmem:[%s0 + $0x8] sm:$0xff]
  %v56 = vld [vmem:[%s0 + $0x10] sm:$0xff]
  %v57 = vld [vmem:[%s0 + $0x18] sm:$0xff]
  %v58 = vunpack.c.l.s8.bf16 %v54
  %v59 = vunpack.c.h.s8.bf16 %v54
  %v60 = vunpack.c.l.s8.bf16 %v55
  %v61 = vunpack.c.h.s8.bf16 %v55
  %v62 = vunpack.c.l.s8.bf16 %v56
  %v63 = vunpack.c.h.s8.bf16 %v56
  %v64 = vunpack.c.l.s8.bf16 %v57
  %v65 = vunpack.c.h.s8.bf16 %v57
  %v66 = vld [vmem:[%s1] sm:$0xf]
  %v67 = vld [vmem:[%s1 + $0x4] sm:$0xf]
  %v68 = vld [vmem:[%s1 + $0x8] sm:$0xf]
  %v69 = vld [vmem:[%s1 + $0xc] sm:$0xf]
  %v70 = vld [vmem:[%s1 + $0x10] sm:$0xf]
  %v71 = vld [vmem:[%s1 + $0x14] sm:$0xf]
  %v72 = vld [vmem:[%s1 + $0x18] sm:$0xf]
  %v73 = vld [vmem:[%s1 + $0x1c] sm:$0xf]
  %v74 = vld [vmem:[%s1 + $0x20] sm:$0xf]
  %v75 = vld [vmem:[%s1 + $0x24] sm:$0xf]
  %v76 = vld [vmem:[%s1 + $0x28] sm:$0xf]
  %v77 = vld [vmem:[%s1 + $0x2c] sm:$0xf]
  %v78 = vld [vmem:[%s1 + $0x30] sm:$0xf]
  %v79 = vld [vmem:[%s1 + $0x34] sm:$0xf]
  %v80 = vld [vmem:[%s1 + $0x38] sm:$0xf]
  %v81 = vld [vmem:[%s1 + $0x3c] sm:$0xf]
  %v98 = vunpack.c.l.b16 %v66
  %v99 = vunpack.c.l.b16 %v67
  %v100 = vunpack.c.l.b16 %v68
  %v101 = vunpack.c.l.b16 %v69
  %v102 = vunpack.c.l.b16 %v70
  %v103 = vunpack.c.l.b16 %v71
  %v104 = vunpack.c.l.b16 %v72
  %v105 = vunpack.c.l.b16 %v73
  %v106 = vunpack.c.l.b16 %v74
  %v107 = vunpack.c.l.b16 %v75
  %v108 = vunpack.c.l.b16 %v76
  %v109 = vunpack.c.l.b16 %v77
  %v110 = vunpack.c.l.b16 %v78
  %v111 = vunpack.c.l.b16 %v79
  %v112 = vunpack.c.l.b16 %v80
  %v113 = vunpack.c.l.b16 %v81
  %v114 = vpack.c.b16 %v99, %v98
  %v115 = vpack.c.b16 %v101, %v100
  %v116 = vpack.c.b16 %v103, %v102
  %v117 = vpack.c.b16 %v105, %v104
  %v118 = vpack.c.b16 %v107, %v106
  %v119 = vpack.c.b16 %v109, %v108
  %v120 = vpack.c.b16 %v111, %v110
  %v121 = vpack.c.b16 %v113, %v112
  %130 = vmatprep.subr.bf16.mxu0 0
  %131 = vmatpush1.bf16.msra.mxu0 %v114
  %132 = vmatprep.subr.bf16.mxu0 0
  %133 = vmatpush1.bf16.msra.mxu0 %v115
  %134 = vmatprep.subr.bf16.mxu0 0
  %135 = vmatpush1.bf16.msra.mxu0 %v116
  %136 = vmatprep.subr.bf16.mxu0 0
  %137 = vmatpush1.bf16.msra.mxu0 %v117
  %138 = vmatprep.subr.bf16.mxu0 0
  %139 = vmatpush1.bf16.msra.mxu0 %v118
  %140 = vmatprep.subr.bf16.mxu0 0
  %141 = vmatpush1.bf16.msra.mxu0 %v119
  %142 = vmatprep.subr.bf16.mxu0 0
  %143 = vmatpush1.bf16.msra.mxu0 %v120
  %144 = vmatprep.subr.bf16.mxu0 0
  %145 = vmatpush1.bf16.msra.mxu0 %v121
  %146 = vmatprep.subr.bf16.mxu0 0
  %147 = vmatpush1.bf16.msra.mxu0 0
  %148 = vmatprep.subr.bf16.mxu0 0
  %149 = vmatpush1.bf16.msra.mxu0 0
  %150 = vmatprep.subr.bf16.mxu0 0
  %151 = vmatpush1.bf16.msra.mxu0 0
  %152 = vmatprep.subr.bf16.mxu0 0
  %153 = vmatpush1.bf16.msra.mxu0 0
  %154 = vmatprep.subr.bf16.mxu0 0
  %155 = vmatpush1.bf16.msra.mxu0 0
  %156 = vmatprep.subr.bf16.mxu0 0
  %157 = vmatpush1.bf16.msra.mxu0 0
  %158 = vmatprep.subr.bf16.mxu0 0
  %159 = vmatpush1.bf16.msra.mxu0 0
  %160 = vmatprep.subr.bf16.mxu0 0
  %161 = vmatpush1.bf16.msra.mxu0 0
  %162 = vmatprep.mubr.bf16.mxu0 0
  %163 = vmatmul.mubr.bf16.gmra.mrb[0].mxu0 %v58
  %v164 = vpop.f32.mrb[0].mxu0
  %v165 = vadd.f32 0.0, %v164
  %v166 = vpop.f32.mrb[0].mxu0
  %v167 = vpop.f32.mrb[0].mxu0
  %v168 = vadd.f32 0.0, %v167
  %v169 = vpop.f32.mrb[0].mxu0
  %170 = vmatprep.mubr.bf16.mxu0 0
  %171 = vmatmul.mubr.bf16.gmra.mrb[0].mxu0 %v59
  %v172 = vpop.f32.mrb[0].mxu0
  %v173 = vadd.f32 0.0, %v172
  %v174 = vpop.f32.mrb[0].mxu0
  %v175 = vpop.f32.mrb[0].mxu0
  %v176 = vadd.f32 0.0, %v175
  %v177 = vpop.f32.mrb[0].mxu0
  %178 = vmatprep.mubr.bf16.mxu0 0
  %179 = vmatmul.mubr.bf16.gmra.mrb[0].mxu0 %v60
  %v180 = vpop.f32.mrb[0].mxu0
  %v181 = vadd.f32 0.0, %v180
  %v182 = vpop.f32.mrb[0].mxu0
  %v183 = vpop.f32.mrb[0].mxu0
  %v184 = vadd.f32 0.0, %v183
  %v185 = vpop.f32.mrb[0].mxu0
  %186 = vmatprep.mubr.bf16.mxu0 0
  %187 = vmatmul.mubr.bf16.gmra.mrb[0].mxu0 %v61
  %v188 = vpop.f32.mrb[0].mxu0
  %v189 = vadd.f32 0.0, %v188
  %v190 = vpop.f32.mrb[0].mxu0
  %v191 = vpop.f32.mrb[0].mxu0
  %v192 = vadd.f32 0.0, %v191
  %v193 = vpop.f32.mrb[0].mxu0
  %194 = vmatprep.mubr.bf16.mxu0 0
  %195 = vmatmul.mubr.bf16.gmra.mrb[0].mxu0 %v62
  %v196 = vpop.f32.mrb[0].mxu0
  %v197 = vadd.f32 0.0, %v196
  %v198 = vpop.f32.mrb[0].mxu0
  %v199 = vpop.f32.mrb[0].mxu0
  %v200 = vadd.f32 0.0, %v199
  %v201 = vpop.f32.mrb[0].mxu0
  %202 = vmatprep.mubr.bf16.mxu0 0
  %203 = vmatmul.mubr.bf16.gmra.mrb[0].mxu0 %v63
  %v204 = vpop.f32.mrb[0].mxu0
  %v205 = vadd.f32 0.0, %v204
  %v206 = vpop.f32.mrb[0].mxu0
  %v207 = vpop.f32.mrb[0].mxu0
  %v208 = vadd.f32 0.0, %v207
  %v209 = vpop.f32.mrb[0].mxu0
  %210 = vmatprep.mubr.bf16.mxu0 0
  %211 = vmatmul.mubr.bf16.gmra.mrb[0].mxu0 %v64
  %v212 = vpop.f32.mrb[0].mxu0
  %v213 = vadd.f32 0.0, %v212
  %v214 = vpop.f32.mrb[0].mxu0
  %v215 = vpop.f32.mrb[0].mxu0
  %v216 = vadd.f32 0.0, %v215
  %v217 = vpop.f32.mrb[0].mxu0
  %218 = vmatprep.mubr.bf16.mxu0 0
  %219 = vmatmul.mubr.bf16.gmra.mrb[0].mxu0 %v65
  %v220 = vpop.f32.mrb[0].mxu0
  %v221 = vadd.f32 0.0, %v220
  %v222 = vpop.f32.mrb[0].mxu0
  %v223 = vpop.f32.mrb[0].mxu0
  %v224 = vadd.f32 0.0, %v223
  %v225 = vpop.f32.mrb[0].mxu0
  %226 = vdwg.mxu0
  %v227 = vadd.f32 %v38, %v165
  %v228 = vadd.f32 %v39, %v168
  %v229 = vadd.f32 %v40, %v173
  %v230 = vadd.f32 %v41, %v176
  %v231 = vadd.f32 %v42, %v181
  %v232 = vadd.f32 %v43, %v184
  %v233 = vadd.f32 %v44, %v189
  %v234 = vadd.f32 %v45, %v192
  %v235 = vadd.f32 %v46, %v197
  %v236 = vadd.f32 %v47, %v200
  %v237 = vadd.f32 %v48, %v205
  %v238 = vadd.f32 %v49, %v208
  %v239 = vadd.f32 %v50, %v213
  %v240 = vadd.f32 %v51, %v216
  %v241 = vadd.f32 %v52, %v221
  %v242 = vadd.f32 %v53, %v224
  %243 = vst [vmem:[#allocation2] sm:$0xff] %v227
  %244 = vst [vmem:[#allocation2 + $0x8] sm:$0xff] %v228
  %245 = vst [vmem:[#allocation2 + $0x10] sm:$0xff] %v229
  %246 = vst [vmem:[#allocation2 + $0x18] sm:$0xff] %v230
  %247 = vst [vmem:[#allocation2 + $0x20] sm:$0xff] %v231
  %248 = vst [vmem:[#allocation2 + $0x28] sm:$0xff] %v232
  %249 = vst [vmem:[#allocation2 + $0x30] sm:$0xff] %v233
  %250 = vst [vmem:[#allocation2 + $0x38] sm:$0xff] %v234
  %251 = vst [vmem:[#allocation2 + $0x40] sm:$0xff] %v235
  %252 = vst [vmem:[#allocation2 + $0x48] sm:$0xff] %v236
  %253 = vst [vmem:[#allocation2 + $0x50] sm:$0xff] %v237
  %254 = vst [vmem:[#allocation2 + $0x58] sm:$0xff] %v238
  %255 = vst [vmem:[#allocation2 + $0x60] sm:$0xff] %v239
  %256 = vst [vmem:[#allocation2 + $0x68] sm:$0xff] %v240
  %257 = vst [vmem:[#allocation2 + $0x70] sm:$0xff] %v241
  %258 = vst [vmem:[#allocation2 + $0x78] sm:$0xff] %v242
  // Predicated region
  $region22: #{graphsage_link_predictor.4} parent=0 // pred_check
    %p259 = pneg %p18
  $region23: #{graphsage_link_predictor.4} parent=0 // pred_check_branch
    %261 = sbr.rel (%p259) target = $region25
  $region24: #{graphsage_link_predictor.4} parent=0 // pred_region
    %v262 = vld [vmem:[#allocation2] sm:$0xff]
    %v263 = vld [vmem:[#allocation2 + $0x8] sm:$0xff]
    %v264 = vld [vmem:[#allocation2 + $0x10] sm:$0xff]
    %v265 = vld [vmem:[#allocation2 + $0x18] sm:$0xff]
    %v266 = vld [vmem:[#allocation2 + $0x20] sm:$0xff]
    %v267 = vld [vmem:[#allocation2 + $0x28] sm:$0xff]
    %v268 = vld [vmem:[#allocation2 + $0x30] sm:$0xff]
    %v269 = vld [vmem:[#allocation2 + $0x38] sm:$0xff]
    %v270 = vld [vmem:[#allocation2 + $0x40] sm:$0xff]
    %v271 = vld [vmem:[#allocation2 + $0x48] sm:$0xff]
    %v272 = vld [vmem:[#allocation2 + $0x50] sm:$0xff]
    %v273 = vld [vmem:[#allocation2 + $0x58] sm:$0xff]
    %v274 = vld [vmem:[#allocation2 + $0x60] sm:$0xff]
    %v275 = vld [vmem:[#allocation2 + $0x68] sm:$0xff]
    %v276 = vld [vmem:[#allocation2 + $0x70] sm:$0xff]
    %v277 = vld [vmem:[#allocation2 + $0x78] sm:$0xff]
    %v278 = vld [vmem:[%s3] sm:$0xff]
    %v279 = vld [vmem:[%s3 + $0x8] sm:$0xff]
    %v280 = vld [vmem:[%s3 + $0x10] sm:$0xff]
    %v281 = vld [vmem:[%s3 + $0x18] sm:$0xff]
    %v282 = vld [vmem:[%s3 + $0x20] sm:$0xff]
    %v283 = vld [vmem:[%s3 + $0x28] sm:$0xff]
    %v284 = vld [vmem:[%s3 + $0x30] sm:$0xff]
    %v285 = vld [vmem:[%s3 + $0x38] sm:$0xff]
    %v286 = vld [vmem:[%s3 + $0x40] sm:$0xff]
    %v287 = vld [vmem:[%s3 + $0x48] sm:$0xff]
    %v288 = vld [vmem:[%s3 + $0x50] sm:$0xff]
    %v289 = vld [vmem:[%s3 + $0x58] sm:$0xff]
    %v290 = vld [vmem:[%s3 + $0x60] sm:$0xff]
    %v291 = vld [vmem:[%s3 + $0x68] sm:$0xff]
    %v292 = vld [vmem:[%s3 + $0x70] sm:$0xff]
    %v293 = vld [vmem:[%s3 + $0x78] sm:$0xff]
    %295 = vset.pattern.permute.xlu0 0
    %296 = vperm.xlu0 %295, %v278
    %v297 = vpop.permute.xlu0 %296
    %300 = vset.pattern.permute.xlu0 0
    %301 = vperm.xlu0 %300, %v279
    %v302 = vpop.permute.xlu0 %301
    %305 = vset.pattern.permute.xlu0 0
    %306 = vperm.xlu0 %305, %v280
    %v307 = vpop.permute.xlu0 %306
    %310 = vset.pattern.permute.xlu0 0
    %311 = vperm.xlu0 %310, %v281
    %v312 = vpop.permute.xlu0 %311
    %315 = vset.pattern.permute.xlu0 0
    %316 = vperm.xlu0 %315, %v282
    %v317 = vpop.permute.xlu0 %316
    %320 = vset.pattern.permute.xlu0 0
    %321 = vperm.xlu0 %320, %v283
    %v322 = vpop.permute.xlu0 %321
    %325 = vset.pattern.permute.xlu0 0
    %326 = vperm.xlu0 %325, %v284
    %v327 = vpop.permute.xlu0 %326
    %330 = vset.pattern.permute.xlu0 0
    %331 = vperm.xlu0 %330, %v285
    %v332 = vpop.permute.xlu0 %331
    %335 = vset.pattern.permute.xlu0 0
    %336 = vperm.xlu0 %335, %v286
    %v337 = vpop.permute.xlu0 %336
    %340 = vset.pattern.permute.xlu0 0
    %341 = vperm.xlu0 %340, %v287
    %v342 = vpop.permute.xlu0 %341
    %345 = vset.pattern.permute.xlu0 0
    %346 = vperm.xlu0 %345, %v288
    %v347 = vpop.permute.xlu0 %346
    %350 = vset.pattern.permute.xlu0 0
    %351 = vperm.xlu0 %350, %v289
    %v352 = vpop.permute.xlu0 %351
    %355 = vset.pattern.permute.xlu0 0
    %356 = vperm.xlu0 %355, %v290
    %v357 = vpop.permute.xlu0 %356
    %360 = vset.pattern.permute.xlu0 0
    %361 = vperm.xlu0 %360, %v291
    %v362 = vpop.permute.xlu0 %361
    %365 = vset.pattern.permute.xlu0 0
    %366 = vperm.xlu0 %365, %v292
    %v367 = vpop.permute.xlu0 %366
    %370 = vset.pattern.permute.xlu0 0
    %371 = vperm.xlu0 %370, %v293
    %v372 = vpop.permute.xlu0 %371
    %v374 = vmul.f32 %v262, %v297
    %v375 = vmul.f32 %v263, %v302
    %v376 = vmul.f32 %v264, %v307
    %v377 = vmul.f32 %v265, %v312
    %v378 = vmul.f32 %v266, %v317
    %v379 = vmul.f32 %v267, %v322
    %v380 = vmul.f32 %v268, %v327
    %v381 = vmul.f32 %v269, %v332
    %v382 = vmul.f32 %v270, %v337
    %v383 = vmul.f32 %v271, %v342
    %v384 = vmul.f32 %v272, %v347
    %v385 = vmul.f32 %v273, %v352
    %v386 = vmul.f32 %v274, %v357
    %v387 = vmul.f32 %v275, %v362
    %v388 = vmul.f32 %v276, %v367
    %v389 = vmul.f32 %v277, %v372
    %v390 = vld [vmem:[%s2] sm:$0xf]
    %v391 = vld [vmem:[%s2 + $0x4] sm:$0xf]
    %v392 = vld [vmem:[%s2 + $0x8] sm:$0xf]
    %v393 = vld [vmem:[%s2 + $0xc] sm:$0xf]
    %v394 = vld [vmem:[%s2 + $0x10] sm:$0xf]
    %v395 = vld [vmem:[%s2 + $0x14] sm:$0xf]
    %v396 = vld [vmem:[%s2 + $0x18] sm:$0xf]
    %v397 = vld [vmem:[%s2 + $0x1c] sm:$0xf]
    %v398 = vld [vmem:[%s2 + $0x20] sm:$0xf]
    %v399 = vld [vmem:[%s2 + $0x24] sm:$0xf]
    %v400 = vld [vmem:[%s2 + $0x28] sm:$0xf]
    %v401 = vld [vmem:[%s2 + $0x2c] sm:$0xf]
    %v402 = vld [vmem:[%s2 + $0x30] sm:$0xf]
    %v403 = vld [vmem:[%s2 + $0x34] sm:$0xf]
    %v404 = vld [vmem:[%s2 + $0x38] sm:$0xf]
    %v405 = vld [vmem:[%s2 + $0x3c] sm:$0xf]
    %v406 = vunpack.c.l.bf16 %v390
    %v407 = vunpack.c.l.bf16 %v391
    %v408 = vunpack.c.l.bf16 %v392
    %v409 = vunpack.c.l.bf16 %v393
    %v410 = vunpack.c.l.bf16 %v394
    %v411 = vunpack.c.l.bf16 %v395
    %v412 = vunpack.c.l.bf16 %v396
    %v413 = vunpack.c.l.bf16 %v397
    %v414 = vunpack.c.l.bf16 %v398
    %v415 = vunpack.c.l.bf16 %v399
    %v416 = vunpack.c.l.bf16 %v400
    %v417 = vunpack.c.l.bf16 %v401
    %v418 = vunpack.c.l.bf16 %v402
    %v419 = vunpack.c.l.bf16 %v403
    %v420 = vunpack.c.l.bf16 %v404
    %v421 = vunpack.c.l.bf16 %v405
    %v422 = vadd.f32 %v374, %v406
    %v423 = vadd.f32 %v375, %v407
    %v424 = vadd.f32 %v376, %v408
    %v425 = vadd.f32 %v377, %v409
    %v426 = vadd.f32 %v378, %v410
    %v427 = vadd.f32 %v379, %v411
    %v428 = vadd.f32 %v380, %v412
    %v429 = vadd.f32 %v381, %v413
    %v430 = vadd.f32 %v382, %v414
    %v431 = vadd.f32 %v383, %v415
    %v432 = vadd.f32 %v384, %v416
    %v433 = vadd.f32 %v385, %v417
    %v434 = vadd.f32 %v386, %v418
    %v435 = vadd.f32 %v387, %v419
    %v436 = vadd.f32 %v388, %v420
    %v437 = vadd.f32 %v389, %v421
    %v438 = vpack.c.bf16 %v423, %v422
    %v439 = vpack.c.bf16 %v425, %v424
    %v440 = vpack.c.bf16 %v427, %v426
    %v441 = vpack.c.bf16 %v429, %v428
    %v442 = vpack.c.bf16 %v431, %v430
    %v443 = vpack.c.bf16 %v433, %v432
    %v444 = vpack.c.bf16 %v435, %v434
    %v445 = vpack.c.bf16 %v437, %v436
    %v454 = vunpack.c.l.b16 %v438
    %v455 = vunpack.c.h.b16 %v438
    %v456 = vunpack.c.l.b16 %v439
    %v457 = vunpack.c.h.b16 %v439
    %v458 = vunpack.c.l.b16 %v440
    %v459 = vunpack.c.h.b16 %v440
    %v460 = vunpack.c.l.b16 %v441
    %v461 = vunpack.c.h.b16 %v441
    %v462 = vunpack.c.l.b16 %v442
    %v463 = vunpack.c.h.b16 %v442
    %v464 = vunpack.c.l.b16 %v443
    %v465 = vunpack.c.h.b16 %v443
    %v466 = vunpack.c.l.b16 %v444
    %v467 = vunpack.c.h.b16 %v444
    %v468 = vunpack.c.l.b16 %v445
    %v469 = vunpack.c.h.b16 %v445
    %v470 = vpack.c.b16 %v454, %v454
    %v471 = vpack.c.b16 %v455, %v455
    %v472 = vpack.c.b16 %v456, %v456
    %v473 = vpack.c.b16 %v457, %v457
    %v474 = vpack.c.b16 %v458, %v458
    %v475 = vpack.c.b16 %v459, %v459
    %v476 = vpack.c.b16 %v460, %v460
    %v477 = vpack.c.b16 %v461, %v461
    %v478 = vpack.c.b16 %v462, %v462
    %v479 = vpack.c.b16 %v463, %v463
    %v480 = vpack.c.b16 %v464, %v464
    %v481 = vpack.c.b16 %v465, %v465
    %v482 = vpack.c.b16 %v466, %v466
    %v483 = vpack.c.b16 %v467, %v467
    %v484 = vpack.c.b16 %v468, %v468
    %v485 = vpack.c.b16 %v469, %v469
    %502 = vst [vmem:[%s4] sm:$0xf] %v470
    %503 = vst [vmem:[%s4 + $0x4] sm:$0xf] %v471
    %504 = vst [vmem:[%s4 + $0x8] sm:$0xf] %v472
    %505 = vst [vmem:[%s4 + $0xc] sm:$0xf] %v473
    %506 = vst [vmem:[%s4 + $0x10] sm:$0xf] %v474
    %507 = vst [vmem:[%s4 + $0x14] sm:$0xf] %v475
    %508 = vst [vmem:[%s4 + $0x18] sm:$0xf] %v476
    %509 = vst [vmem:[%s4 + $0x1c] sm:$0xf] %v477
    %510 = vst [vmem:[%s4 + $0x20] sm:$0xf] %v478
    %511 = vst [vmem:[%s4 + $0x24] sm:$0xf] %v479
    %512 = vst [vmem:[%s4 + $0x28] sm:$0xf] %v480
    %513 = vst [vmem:[%s4 + $0x2c] sm:$0xf] %v481
    %514 = vst [vmem:[%s4 + $0x30] sm:$0xf] %v482
    %515 = vst [vmem:[%s4 + $0x34] sm:$0xf] %v483
    %516 = vst [vmem:[%s4 + $0x38] sm:$0xf] %v484
    %517 = vst [vmem:[%s4 + $0x3c] sm:$0xf] %v485
  $region25: #{graphsage_link_predictor.4} parent=0 // pred_fallthru
    _
  // Predicated region
  $region26: #{graphsage_link_predictor.4} parent=0 // pred_check
    _
  $region27: #{graphsage_link_predictor.4} parent=0 // pred_check_branch
    %519 = sbr.rel (0) target = $region29
  $region28: #{graphsage_link_predictor.4} parent=0 // pred_region
    _
  $region29: #{graphsage_link_predictor.4} parent=0 // pred_fallthru
    _
  // Predicated region
  $region30: #{graphsage_link_predictor.4} parent=0 // pred_check
    _
  $region31: #{graphsage_link_predictor.4} parent=0 // pred_check_branch
    %521 = sbr.rel (0) target = $region33
  $region32: #{graphsage_link_predictor.4} parent=0 // pred_region
    _
  $region33: #{graphsage_link_predictor.4} parent=0 // pred_fallthru
    _

// kernel: graphsage_link_predictor.5
$region0: #{graphsage_link_predictor.5}
  #allocation0 [shape = 'u32[]', space=smem, size = 0x4, offset = 0x4, fixed_abs, tag = 'smem constant byte address 0x4 - core index']
  #allocation1 [shape = 'u32[144,128]{1,0:T(1,128)}', space=vmem, size = 0x12000, scoped, tag = 'internal scratch']
  #allocation2 [shape = 'f32[1,1]{1,0:T(1,128)S(1)}', space=vmem, size = 0x200, scoped, tag = 'scoped memory for graphsage_link_predictor.5']
  %s0 = inlined_call_operand.vmem [shape: bf16[128,128], index: 0, kind: input, shape index: {}]
  %s1 = inlined_call_operand.vmem [shape: bf16[128,128], index: 1, kind: input, shape index: {}]
  %s2 = inlined_call_operand.vmem [shape: bf16[128,128], index: 2, kind: input, shape index: {}]
  %s3 = inlined_call_operand.vmem [shape: bf16[128,128], index: 3, kind: input, shape index: {}]
  %s4 = inlined_call_operand.vmem [shape: f32[1,128], index: 4, kind: input, shape index: {}]
  %s5 = inlined_call_operand.vmem [shape: f32[1,128], index: 5, kind: input, shape index: {}]
  %s6 = inlined_call_operand.<no memory space> [shape: f32[1,1], index: 6, kind: input, shape index: {}]
  %s7 = inlined_call_operand.vmem [shape: f32[1,128], index: 7, kind: output, shape index: {}]
  %s8 = sld [smem:[#allocation0]]
  $region38: #{graphsage_link_predictor.5} parent=0
    _
  %s10 = ssub.s32 1, %s8
  %s11 = scalar_select 0, %s10, %s8
  %v12 = vstv %s6
  %13 = vst [vmem:[#allocation2] sm:$0x1] %v12
  // Predicated region
  $region2: #{graphsage_link_predictor.5} parent=0 // pred_check
    _
  $region3: #{graphsage_link_predictor.5} parent=0 // pred_check_branch
    %15 = sbr.rel (0) target = $region5
  $region4: #{graphsage_link_predictor.5} parent=0 // pred_region
    _
  $region5: #{graphsage_link_predictor.5} parent=0 // pred_fallthru
    _
  // Predicated region
  $region6: #{graphsage_link_predictor.5} parent=0 // pred_check
    _
  $region7: #{graphsage_link_predictor.5} parent=0 // pred_check_branch
    %17 = sbr.rel (0) target = $region9
  $region8: #{graphsage_link_predictor.5} parent=0 // pred_region
    _
  $region9: #{graphsage_link_predictor.5} parent=0 // pred_fallthru
    _
  // Predicated region
  $region10: #{graphsage_link_predictor.5} parent=0 // pred_check
    _
  $region11: #{graphsage_link_predictor.5} parent=0 // pred_check_branch
    %19 = sbr.rel (0) target = $region13
  $region12: #{graphsage_link_predictor.5} parent=0 // pred_region
    _
  $region13: #{graphsage_link_predictor.5} parent=0 // pred_fallthru
    _
  // Predicated region
  $region14: #{graphsage_link_predictor.5} parent=0 // pred_check
    _
  $region15: #{graphsage_link_predictor.5} parent=0 // pred_check_branch
    %21 = sbr.rel (0) target = $region17
  $region16: #{graphsage_link_predictor.5} parent=0 // pred_region
    _
  $region17: #{graphsage_link_predictor.5} parent=0 // pred_fallthru
    _
  // Predicated region
  $region18: #{graphsage_link_predictor.5} parent=0 // pred_check
    _
  $region19: #{graphsage_link_predictor.5} parent=0 // pred_check_branch
    %23 = sbr.rel (0) target = $region21
  $region20: #{graphsage_link_predictor.5} parent=0 // pred_region
    _
  $region21: #{graphsage_link_predictor.5} parent=0 // pred_fallthru
    _
  // Predicated region
  $region22: #{graphsage_link_predictor.5} parent=0 // pred_check
    _
  $region23: #{graphsage_link_predictor.5} parent=0 // pred_check_branch
    %25 = sbr.rel (0) target = $region25
  $region24: #{graphsage_link_predictor.5} parent=0 // pred_region
    _
  $region25: #{graphsage_link_predictor.5} parent=0 // pred_fallthru
    _
  // Predicated region
  $region26: #{graphsage_link_predictor.5} parent=0 // pred_check
    _
  $region27: #{graphsage_link_predictor.5} parent=0 // pred_check_branch
    %27 = sbr.rel (0) target = $region29
  $region28: #{graphsage_link_predictor.5} parent=0 // pred_region
    _
  $region29: #{graphsage_link_predictor.5} parent=0 // pred_fallthru
    _
  %v29 = vld [vmem:[%s0] sm:$0xf]
  %v30 = vld [vmem:[%s0 + $0x4] sm:$0xf]
  %v31 = vld [vmem:[%s0 + $0x8] sm:$0xf]
  %v32 = vld [vmem:[%s0 + $0xc] sm:$0xf]
  %v33 = vld [vmem:[%s0 + $0x10] sm:$0xf]
  %v34 = vld [vmem:[%s0 + $0x14] sm:$0xf]
  %v35 = vld [vmem:[%s0 + $0x18] sm:$0xf]
  %v36 = vld [vmem:[%s0 + $0x1c] sm:$0xf]
  %v37 = vld [vmem:[%s0 + $0x20] sm:$0xf]
  %v38 = vld [vmem:[%s0 + $0x24] sm:$0xf]
  %v39 = vld [vmem:[%s0 + $0x28] sm:$0xf]
  %v40 = vld [vmem:[%s0 + $0x2c] sm:$0xf]
  %v41 = vld [vmem:[%s0 + $0x30] sm:$0xf]
  %v42 = vld [vmem:[%s0 + $0x34] sm:$0xf]
  %v43 = vld [vmem:[%s0 + $0x38] sm:$0xf]
  %v44 = vld [vmem:[%s0 + $0x3c] sm:$0xf]
  %v45 = vld [vmem:[%s2] sm:$0xf]
  %v46 = vld [vmem:[%s2 + $0x4] sm:$0xf]
  %v47 = vld [vmem:[%s2 + $0x8] sm:$0xf]
  %v48 = vld [vmem:[%s2 + $0xc] sm:$0xf]
  %v49 = vld [vmem:[%s2 + $0x10] sm:$0xf]
  %v50 = vld [vmem:[%s2 + $0x14] sm:$0xf]
  %v51 = vld [vmem:[%s2 + $0x18] sm:$0xf]
  %v52 = vld [vmem:[%s2 + $0x1c] sm:$0xf]
  %v53 = vld [vmem:[%s2 + $0x20] sm:$0xf]
  %v54 = vld [vmem:[%s2 + $0x24] sm:$0xf]
  %v55 = vld [vmem:[%s2 + $0x28] sm:$0xf]
  %v56 = vld [vmem:[%s2 + $0x2c] sm:$0xf]
  %v57 = vld [vmem:[%s2 + $0x30] sm:$0xf]
  %v58 = vld [vmem:[%s2 + $0x34] sm:$0xf]
  %v59 = vld [vmem:[%s2 + $0x38] sm:$0xf]
  %v60 = vld [vmem:[%s2 + $0x3c] sm:$0xf]
  %v61 = vld [vmem:[%s1] sm:$0xf]
  %v62 = vld [vmem:[%s1 + $0x4] sm:$0xf]
  %v63 = vld [vmem:[%s1 + $0x8] sm:$0xf]
  %v64 = vld [vmem:[%s1 + $0xc] sm:$0xf]
  %v65 = vld [vmem:[%s1 + $0x10] sm:$0xf]
  %v66 = vld [vmem:[%s1 + $0x14] sm:$0xf]
  %v67 = vld [vmem:[%s1 + $0x18] sm:$0xf]
  %v68 = vld [vmem:[%s1 + $0x1c] sm:$0xf]
  %v69 = vld [vmem:[%s1 + $0x20] sm:$0xf]
  %v70 = vld [vmem:[%s1 + $0x24] sm:$0xf]
  %v71 = vld [vmem:[%s1 + $0x28] sm:$0xf]
  %v72 = vld [vmem:[%s1 + $0x2c] sm:$0xf]
  %v73 = vld [vmem:[%s1 + $0x30] sm:$0xf]
  %v74 = vld [vmem:[%s1 + $0x34] sm:$0xf]
  %v75 = vld [vmem:[%s1 + $0x38] sm:$0xf]
  %v76 = vld [vmem:[%s1 + $0x3c] sm:$0xf]
  %v77 = vld [vmem:[%s3] sm:$0xf]
  %v78 = vld [vmem:[%s3 + $0x4] sm:$0xf]
  %v79 = vld [vmem:[%s3 + $0x8] sm:$0xf]
  %v80 = vld [vmem:[%s3 + $0xc] sm:$0xf]
  %v81 = vld [vmem:[%s3 + $0x10] sm:$0xf]
  %v82 = vld [vmem:[%s3 + $0x14] sm:$0xf]
  %v83 = vld [vmem:[%s3 + $0x18] sm:$0xf]
  %v84 = vld [vmem:[%s3 + $0x1c] sm:$0xf]
  %v85 = vld [vmem:[%s3 + $0x20] sm:$0xf]
  %v86 = vld [vmem:[%s3 + $0x24] sm:$0xf]
  %v87 = vld [vmem:[%s3 + $0x28] sm:$0xf]
  %v88 = vld [vmem:[%s3 + $0x2c] sm:$0xf]
  %v89 = vld [vmem:[%s3 + $0x30] sm:$0xf]
  %v90 = vld [vmem:[%s3 + $0x34] sm:$0xf]
  %v91 = vld [vmem:[%s3 + $0x38] sm:$0xf]
  %v92 = vld [vmem:[%s3 + $0x3c] sm:$0xf]
  %v109 = vunpack.c.l.b16 %v61
  %v110 = vunpack.c.l.b16 %v62
  %v111 = vunpack.c.l.b16 %v63
  %v112 = vunpack.c.l.b16 %v64
  %v113 = vunpack.c.l.b16 %v65
  %v114 = vunpack.c.l.b16 %v66
  %v115 = vunpack.c.l.b16 %v67
  %v116 = vunpack.c.l.b16 %v68
  %v117 = vunpack.c.l.b16 %v69
  %v118 = vunpack.c.l.b16 %v70
  %v119 = vunpack.c.l.b16 %v71
  %v120 = vunpack.c.l.b16 %v72
  %v121 = vunpack.c.l.b16 %v73
  %v122 = vunpack.c.l.b16 %v74
  %v123 = vunpack.c.l.b16 %v75
  %v124 = vunpack.c.l.b16 %v76
  %v125 = vpack.c.b16 %v110, %v109
  %v126 = vpack.c.b16 %v112, %v111
  %v127 = vpack.c.b16 %v114, %v113
  %v128 = vpack.c.b16 %v116, %v115
  %v129 = vpack.c.b16 %v118, %v117
  %v130 = vpack.c.b16 %v120, %v119
  %v131 = vpack.c.b16 %v122, %v121
  %v132 = vpack.c.b16 %v124, %v123
  %v157 = vunpack.c.l.b16 %v77
  %v158 = vunpack.c.l.b16 %v78
  %v159 = vunpack.c.l.b16 %v79
  %v160 = vunpack.c.l.b16 %v80
  %v161 = vunpack.c.l.b16 %v81
  %v162 = vunpack.c.l.b16 %v82
  %v163 = vunpack.c.l.b16 %v83
  %v164 = vunpack.c.l.b16 %v84
  %v165 = vunpack.c.l.b16 %v85
  %v166 = vunpack.c.l.b16 %v86
  %v167 = vunpack.c.l.b16 %v87
  %v168 = vunpack.c.l.b16 %v88
  %v169 = vunpack.c.l.b16 %v89
  %v170 = vunpack.c.l.b16 %v90
  %v171 = vunpack.c.l.b16 %v91
  %v172 = vunpack.c.l.b16 %v92
  %v173 = vpack.c.b16 %v158, %v157
  %v174 = vpack.c.b16 %v160, %v159
  %v175 = vpack.c.b16 %v162, %v161
  %v176 = vpack.c.b16 %v164, %v163
  %v177 = vpack.c.b16 %v166, %v165
  %v178 = vpack.c.b16 %v168, %v167
  %v179 = vpack.c.b16 %v170, %v169
  %v180 = vpack.c.b16 %v172, %v171
  %189 = vmatprep.subr.bf16.mxu0 0
  %190 = vmatpush1.bf16.msra.mxu0 %v173
  %191 = vmatprep.subr.bf16.mxu0 0
  %192 = vmatpush1.bf16.msra.mxu0 %v174
  %193 = vmatprep.subr.bf16.mxu0 0
  %194 = vmatpush1.bf16.msra.mxu0 %v175
  %195 = vmatprep.subr.bf16.mxu0 0
  %196 = vmatpush1.bf16.msra.mxu0 %v176
  %197 = vmatprep.subr.bf16.mxu0 0
  %198 = vmatpush1.bf16.msra.mxu0 %v177
  %199 = vmatprep.subr.bf16.mxu0 0
  %200 = vmatpush1.bf16.msra.mxu0 %v178
  %201 = vmatprep.subr.bf16.mxu0 0
  %202 = vmatpush1.bf16.msra.mxu0 %v179
  %203 = vmatprep.subr.bf16.mxu0 0
  %204 = vmatpush1.bf16.msra.mxu0 %v180
  %205 = vmatprep.subr.bf16.mxu0 0
  %206 = vmatpush1.bf16.msra.mxu0 0
  %207 = vmatprep.subr.bf16.mxu0 0
  %208 = vmatpush1.bf16.msra.mxu0 0
  %209 = vmatprep.subr.bf16.mxu0 0
  %210 = vmatpush1.bf16.msra.mxu0 0
  %211 = vmatprep.subr.bf16.mxu0 0
  %212 = vmatpush1.bf16.msra.mxu0 0
  %213 = vmatprep.subr.bf16.mxu0 0
  %214 = vmatpush1.bf16.msra.mxu0 0
  %215 = vmatprep.subr.bf16.mxu0 0
  %216 = vmatpush1.bf16.msra.mxu0 0
  %217 = vmatprep.subr.bf16.mxu0 0
  %218 = vmatpush1.bf16.msra.mxu0 0
  %219 = vmatprep.subr.bf16.mxu0 0
  %220 = vmatpush1.bf16.msra.mxu0 0
  %221 = vmatprep.mubr.bf16.mxu0 0
  %222 = vmatmul.mubr.bf16.gmra.mrb[0].mxu0 %v125
  %v223 = vpop.f32.mrb[0].mxu0
  %v224 = vadd.f32 0.0, %v223
  %v225 = vpop.f32.mrb[0].mxu0
  %v226 = vpop.f32.mrb[0].mxu0
  %v227 = vadd.f32 0.0, %v226
  %v228 = vpop.f32.mrb[0].mxu0
  %229 = vmatprep.mubr.bf16.mxu0 0
  %230 = vmatmul.mubr.bf16.gmra.mrb[0].mxu0 %v126
  %v231 = vpop.f32.mrb[0].mxu0
  %v232 = vadd.f32 0.0, %v231
  %v233 = vpop.f32.mrb[0].mxu0
  %v234 = vpop.f32.mrb[0].mxu0
  %v235 = vadd.f32 0.0, %v234
  %v236 = vpop.f32.mrb[0].mxu0
  %237 = vmatprep.mubr.bf16.mxu0 0
  %238 = vmatmul.mubr.bf16.gmra.mrb[0].mxu0 %v127
  %v239 = vpop.f32.mrb[0].mxu0
  %v240 = vadd.f32 0.0, %v239
  %v241 = vpop.f32.mrb[0].mxu0
  %v242 = vpop.f32.mrb[0].mxu0
  %v243 = vadd.f32 0.0, %v242
  %v244 = vpop.f32.mrb[0].mxu0
  %245 = vmatprep.mubr.bf16.mxu0 0
  %246 = vmatmul.mubr.bf16.gmra.mrb[0].mxu0 %v128
  %v247 = vpop.f32.mrb[0].mxu0
  %v248 = vadd.f32 0.0, %v247
  %v249 = vpop.f32.mrb[0].mxu0
  %v250 = vpop.f32.mrb[0].mxu0
  %v251 = vadd.f32 0.0, %v250
  %v252 = vpop.f32.mrb[0].mxu0
  %253 = vmatprep.mubr.bf16.mxu0 0
  %254 = vmatmul.mubr.bf16.gmra.mrb[0].mxu0 %v129
  %v255 = vpop.f32.mrb[0].mxu0
  %v256 = vadd.f32 0.0, %v255
  %v257 = vpop.f32.mrb[0].mxu0
  %v258 = vpop.f32.mrb[0].mxu0
  %v259 = vadd.f32 0.0, %v258
  %v260 = vpop.f32.mrb[0].mxu0
  %261 = vmatprep.mubr.bf16.mxu0 0
  %262 = vmatmul.mubr.bf16.gmra.mrb[0].mxu0 %v130
  %v263 = vpop.f32.mrb[0].mxu0
  %v264 = vadd.f32 0.0, %v263
  %v265 = vpop.f32.mrb[0].mxu0
  %v266 = vpop.f32.mrb[0].mxu0
  %v267 = vadd.f32 0.0, %v266
  %v268 = vpop.f32.mrb[0].mxu0
  %269 = vmatprep.mubr.bf16.mxu0 0
  %270 = vmatmul.mubr.bf16.gmra.mrb[0].mxu0 %v131
  %v271 = vpop.f32.mrb[0].mxu0
  %v272 = vadd.f32 0.0, %v271
  %v273 = vpop.f32.mrb[0].mxu0
  %v274 = vpop.f32.mrb[0].mxu0
  %v275 = vadd.f32 0.0, %v274
  %v276 = vpop.f32.mrb[0].mxu0
  %277 = vmatprep.mubr.bf16.mxu0 0
  %278 = vmatmul.mubr.bf16.gmra.mrb[0].mxu0 %v132
  %v279 = vpop.f32.mrb[0].mxu0
  %v280 = vadd.f32 0.0, %v279
  %v281 = vpop.f32.mrb[0].mxu0
  %v282 = vpop.f32.mrb[0].mxu0
  %v283 = vadd.f32 0.0, %v282
  %v284 = vpop.f32.mrb[0].mxu0
  %285 = vdwg.mxu0
  %v302 = vunpack.c.l.b16 %v29
  %v303 = vunpack.c.l.b16 %v30
  %v304 = vunpack.c.l.b16 %v31
  %v305 = vunpack.c.l.b16 %v32
  %v306 = vunpack.c.l.b16 %v33
  %v307 = vunpack.c.l.b16 %v34
  %v308 = vunpack.c.l.b16 %v35
  %v309 = vunpack.c.l.b16 %v36
  %v310 = vunpack.c.l.b16 %v37
  %v311 = vunpack.c.l.b16 %v38
  %v312 = vunpack.c.l.b16 %v39
  %v313 = vunpack.c.l.b16 %v40
  %v314 = vunpack.c.l.b16 %v41
  %v315 = vunpack.c.l.b16 %v42
  %v316 = vunpack.c.l.b16 %v43
  %v317 = vunpack.c.l.b16 %v44
  %v318 = vpack.c.b16 %v303, %v302
  %v319 = vpack.c.b16 %v305, %v304
  %v320 = vpack.c.b16 %v307, %v306
  %v321 = vpack.c.b16 %v309, %v308
  %v322 = vpack.c.b16 %v311, %v310
  %v323 = vpack.c.b16 %v313, %v312
  %v324 = vpack.c.b16 %v315, %v314
  %v325 = vpack.c.b16 %v317, %v316
  %v350 = vunpack.c.l.b16 %v45
  %v351 = vunpack.c.l.b16 %v46
  %v352 = vunpack.c.l.b16 %v47
  %v353 = vunpack.c.l.b16 %v48
  %v354 = vunpack.c.l.b16 %v49
  %v355 = vunpack.c.l.b16 %v50
  %v356 = vunpack.c.l.b16 %v51
  %v357 = vunpack.c.l.b16 %v52
  %v358 = vunpack.c.l.b16 %v53
  %v359 = vunpack.c.l.b16 %v54
  %v360 = vunpack.c.l.b16 %v55
  %v361 = vunpack.c.l.b16 %v56
  %v362 = vunpack.c.l.b16 %v57
  %v363 = vunpack.c.l.b16 %v58
  %v364 = vunpack.c.l.b16 %v59
  %v365 = vunpack.c.l.b16 %v60
  %v366 = vpack.c.b16 %v351, %v350
  %v367 = vpack.c.b16 %v353, %v352
  %v368 = vpack.c.b16 %v355, %v354
  %v369 = vpack.c.b16 %v357, %v356
  %v370 = vpack.c.b16 %v359, %v358
  %v371 = vpack.c.b16 %v361, %v360
  %v372 = vpack.c.b16 %v363, %v362
  %v373 = vpack.c.b16 %v365, %v364
  %382 = vmatprep.subr.bf16.mxu0 0
  %383 = vmatpush1.bf16.msra.mxu0 %v366
  %384 = vmatprep.subr.bf16.mxu0 0
  %385 = vmatpush1.bf16.msra.mxu0 %v367
  %386 = vmatprep.subr.bf16.mxu0 0
  %387 = vmatpush1.bf16.msra.mxu0 %v368
  %388 = vmatprep.subr.bf16.mxu0 0
  %389 = vmatpush1.bf16.msra.mxu0 %v369
  %390 = vmatprep.subr.bf16.mxu0 0
  %391 = vmatpush1.bf16.msra.mxu0 %v370
  %392 = vmatprep.subr.bf16.mxu0 0
  %393 = vmatpush1.bf16.msra.mxu0 %v371
  %394 = vmatprep.subr.bf16.mxu0 0
  %395 = vmatpush1.bf16.msra.mxu0 %v372
  %396 = vmatprep.subr.bf16.mxu0 0
  %397 = vmatpush1.bf16.msra.mxu0 %v373
  %398 = vmatprep.subr.bf16.mxu0 0
  %399 = vmatpush1.bf16.msra.mxu0 0
  %400 = vmatprep.subr.bf16.mxu0 0
  %401 = vmatpush1.bf16.msra.mxu0 0
  %402 = vmatprep.subr.bf16.mxu0 0
  %403 = vmatpush1.bf16.msra.mxu0 0
  %404 = vmatprep.subr.bf16.mxu0 0
  %405 = vmatpush1.bf16.msra.mxu0 0
  %406 = vmatprep.subr.bf16.mxu0 0
  %407 = vmatpush1.bf16.msra.mxu0 0
  %408 = vmatprep.subr.bf16.mxu0 0
  %409 = vmatpush1.bf16.msra.mxu0 0
  %410 = vmatprep.subr.bf16.mxu0 0
  %411 = vmatpush1.bf16.msra.mxu0 0
  %412 = vmatprep.subr.bf16.mxu0 0
  %413 = vmatpush1.bf16.msra.mxu0 0
  %414 = vmatprep.mubr.bf16.mxu0 0
  %415 = vmatmul.mubr.bf16.gmra.mrb[0].mxu0 %v318
  %v416 = vpop.f32.mrb[0].mxu0
  %v417 = vadd.f32 %v224, %v416
  %v418 = vpop.f32.mrb[0].mxu0
  %v419 = vpop.f32.mrb[0].mxu0
  %v420 = vadd.f32 %v227, %v419
  %v421 = vpop.f32.mrb[0].mxu0
  %422 = vmatprep.mubr.bf16.mxu0 0
  %423 = vmatmul.mubr.bf16.gmra.mrb[0].mxu0 %v319
  %v424 = vpop.f32.mrb[0].mxu0
  %v425 = vadd.f32 %v232, %v424
  %v426 = vpop.f32.mrb[0].mxu0
  %v427 = vpop.f32.mrb[0].mxu0
  %v428 = vadd.f32 %v235, %v427
  %v429 = vpop.f32.mrb[0].mxu0
  %430 = vmatprep.mubr.bf16.mxu0 0
  %431 = vmatmul.mubr.bf16.gmra.mrb[0].mxu0 %v320
  %v432 = vpop.f32.mrb[0].mxu0
  %v433 = vadd.f32 %v240, %v432
  %v434 = vpop.f32.mrb[0].mxu0
  %v435 = vpop.f32.mrb[0].mxu0
  %v436 = vadd.f32 %v243, %v435
  %v437 = vpop.f32.mrb[0].mxu0
  %438 = vmatprep.mubr.bf16.mxu0 0
  %439 = vmatmul.mubr.bf16.gmra.mrb[0].mxu0 %v321
  %v440 = vpop.f32.mrb[0].mxu0
  %v441 = vadd.f32 %v248, %v440
  %v442 = vpop.f32.mrb[0].mxu0
  %v443 = vpop.f32.mrb[0].mxu0
  %v444 = vadd.f32 %v251, %v443
  %v445 = vpop.f32.mrb[0].mxu0
  %446 = vmatprep.mubr.bf16.mxu0 0
  %447 = vmatmul.mubr.bf16.gmra.mrb[0].mxu0 %v322
  %v448 = vpop.f32.mrb[0].mxu0
  %v449 = vadd.f32 %v256, %v448
  %v450 = vpop.f32.mrb[0].mxu0
  %v451 = vpop.f32.mrb[0].mxu0
  %v452 = vadd.f32 %v259, %v451
  %v453 = vpop.f32.mrb[0].mxu0
  %454 = vmatprep.mubr.bf16.mxu0 0
  %455 = vmatmul.mubr.bf16.gmra.mrb[0].mxu0 %v323
  %v456 = vpop.f32.mrb[0].mxu0
  %v457 = vadd.f32 %v264, %v456
  %v458 = vpop.f32.mrb[0].mxu0
  %v459 = vpop.f32.mrb[0].mxu0
  %v460 = vadd.f32 %v267, %v459
  %v461 = vpop.f32.mrb[0].mxu0
  %462 = vmatprep.mubr.bf16.mxu0 0
  %463 = vmatmul.mubr.bf16.gmra.mrb[0].mxu0 %v324
  %v464 = vpop.f32.mrb[0].mxu0
  %v465 = vadd.f32 %v272, %v464
  %v466 = vpop.f32.mrb[0].mxu0
  %v467 = vpop.f32.mrb[0].mxu0
  %v468 = vadd.f32 %v275, %v467
  %v469 = vpop.f32.mrb[0].mxu0
  %470 = vmatprep.mubr.bf16.mxu0 0
  %471 = vmatmul.mubr.bf16.gmra.mrb[0].mxu0 %v325
  %v472 = vpop.f32.mrb[0].mxu0
  %v473 = vadd.f32 %v280, %v472
  %v474 = vpop.f32.mrb[0].mxu0
  %v475 = vpop.f32.mrb[0].mxu0
  %v476 = vadd.f32 %v283, %v475
  %v477 = vpop.f32.mrb[0].mxu0
  %478 = vdwg.mxu0
  %v479 = vld [vmem:[%s4] sm:$0x1]
  %v481 = vlaneseq
  %v482 = vshrl.u32 %v481, 7
  %v483 = vsub.s32 0, %v482
  %v484 = vrot.slane %v479, %v483
  %v486 = vadd.f32 %v417, %v484
  %v487 = vadd.f32 %v420, %v484
  %v488 = vadd.f32 %v425, %v484
  %v489 = vadd.f32 %v428, %v484
  %v490 = vadd.f32 %v433, %v484
  %v491 = vadd.f32 %v436, %v484
  %v492 = vadd.f32 %v441, %v484
  %v493 = vadd.f32 %v444, %v484
  %v494 = vadd.f32 %v449, %v484
  %v495 = vadd.f32 %v452, %v484
  %v496 = vadd.f32 %v457, %v484
  %v497 = vadd.f32 %v460, %v484
  %v498 = vadd.f32 %v465, %v484
  %v499 = vadd.f32 %v468, %v484
  %v500 = vadd.f32 %v473, %v484
  %v501 = vadd.f32 %v476, %v484
  %v502 = vmax.f32 %v486, 0.0
  %v503 = vmax.f32 %v487, 0.0
  %v504 = vmax.f32 %v488, 0.0
  %v505 = vmax.f32 %v489, 0.0
  %v506 = vmax.f32 %v490, 0.0
  %v507 = vmax.f32 %v491, 0.0
  %v508 = vmax.f32 %v492, 0.0
  %v509 = vmax.f32 %v493, 0.0
  %v510 = vmax.f32 %v494, 0.0
  %v511 = vmax.f32 %v495, 0.0
  %v512 = vmax.f32 %v496, 0.0
  %v513 = vmax.f32 %v497, 0.0
  %v514 = vmax.f32 %v498, 0.0
  %v515 = vmax.f32 %v499, 0.0
  %v516 = vmax.f32 %v500, 0.0
  %v517 = vmax.f32 %v501, 0.0
  %v518 = vld [vmem:[%s5] sm:$0x1]
  %v519 = vld [vmem:[#allocation2] sm:$0x1]
  %521 = vset.pattern.permute.xlu0 0
  %522 = vperm.xlu0 %521, %v519
  %v523 = vpop.permute.xlu0 %522
  %v525 = vlaneseq
  %v526 = vshrl.u32 %v525, 7
  %v527 = vsub.s32 0, %v526
  %v528 = vrot.slane %v523, %v527
  %529 = vmatprep.subr.mxu0 0.0
  %530 = vmatpush1.xpose.msra.mxu0 %v502
  %531 = vmatprep.subr.mxu0 0.0
  %532 = vmatpush1.xpose.msra.mxu0 %v503
  %533 = vmatprep.subr.mxu0 0.0
  %534 = vmatpush1.xpose.msra.mxu0 %v504
  %535 = vmatprep.subr.mxu0 0.0
  %536 = vmatpush1.xpose.msra.mxu0 %v505
  %537 = vmatprep.subr.mxu0 0.0
  %538 = vmatpush1.xpose.msra.mxu0 %v506
  %539 = vmatprep.subr.mxu0 0.0
  %540 = vmatpush1.xpose.msra.mxu0 %v507
  %541 = vmatprep.subr.mxu0 0.0
  %542 = vmatpush1.xpose.msra.mxu0 %v508
  %543 = vmatprep.subr.mxu0 0.0
  %544 = vmatpush1.xpose.msra.mxu0 %v509
  %545 = vmatprep.subr.mxu0 0.0
  %546 = vmatpush1.xpose.msra.mxu0 %v510
  %547 = vmatprep.subr.mxu0 0.0
  %548 = vmatpush1.xpose.msra.mxu0 %v511
  %549 = vmatprep.subr.mxu0 0.0
  %550 = vmatpush1.xpose.msra.mxu0 %v512
  %551 = vmatprep.subr.mxu0 0.0
  %552 = vmatpush1.xpose.msra.mxu0 %v513
  %553 = vmatprep.subr.mxu0 0.0
  %554 = vmatpush1.xpose.msra.mxu0 %v514
  %555 = vmatprep.subr.mxu0 0.0
  %556 = vmatpush1.xpose.msra.mxu0 %v515
  %557 = vmatprep.subr.mxu0 0.0
  %558 = vmatpush1.xpose.msra.mxu0 %v516
  %559 = vmatprep.subr.mxu0 0.0
  %560 = vmatpush1.xpose.msra.mxu0 %v517
  %561 = vmatprep.subr.mxu0 0.0
  %562 = vmatpush1.xpose.msra.mxu0 0.0
  %563 = vmatprep.subr.mxu0 0.0
  %564 = vmatpush1.xpose.msra.mxu0 0.0
  %565 = vmatprep.subr.mxu0 0.0
  %566 = vmatpush1.xpose.msra.mxu0 0.0
  %567 = vmatprep.subr.mxu0 0.0
  %568 = vmatpush1.xpose.msra.mxu0 0.0
  %569 = vmatprep.subr.mxu0 0.0
  %570 = vmatpush1.xpose.msra.mxu0 0.0
  %571 = vmatprep.subr.mxu0 0.0
  %572 = vmatpush1.xpose.msra.mxu0 0.0
  %573 = vmatprep.subr.mxu0 0.0
  %574 = vmatpush1.xpose.msra.mxu0 0.0
  %575 = vmatprep.subr.mxu0 0.0
  %576 = vmatpush1.xpose.msra.mxu0 0.0
  %577 = vmatprep.subr.mxu0 0.0
  %578 = vmatpush1.xpose.msra.mxu0 0.0
  %579 = vmatprep.subr.mxu0 0.0
  %580 = vmatpush1.xpose.msra.mxu0 0.0
  %581 = vmatprep.subr.mxu0 0.0
  %582 = vmatpush1.xpose.msra.mxu0 0.0
  %583 = vmatprep.subr.mxu0 0.0
  %584 = vmatpush1.xpose.msra.mxu0 0.0
  %585 = vmatprep.subr.mxu0 0.0
  %586 = vmatpush1.xpose.msra.mxu0 0.0
  %587 = vmatprep.subr.mxu0 0.0
  %588 = vmatpush1.xpose.msra.mxu0 0.0
  %589 = vmatprep.subr.mxu0 0.0
  %590 = vmatpush1.xpose.msra.mxu0 0.0
  %591 = vmatprep.subr.mxu0 0.0
  %592 = vmatpush1.xpose.msra.mxu0 0.0
  %593 = vmatprep.mubr.f32.mxu0 0.0
  %594 = vmatmul.mubr.f32.gmra.mrb[0].mxu0 %v518
  %v595 = vpop.f32.mrb[0].mxu0
  %v596 = vadd.f32 %v528, %v595
  %v597 = vpop.f32.mrb[0].mxu0
  %598 = vdwg.mxu0
  %599 = vst [vmem:[%s7] sm:$0x1] %v596
  // Predicated region
  $region30: #{graphsage_link_predictor.5} parent=0 // pred_check
    _
  $region31: #{graphsage_link_predictor.5} parent=0 // pred_check_branch
    %601 = sbr.rel (0) target = $region33
  $region32: #{graphsage_link_predictor.5} parent=0 // pred_region
    _
  $region33: #{graphsage_link_predictor.5} parent=0 // pred_fallthru
    _
  // Predicated region
  $region34: #{graphsage_link_predictor.5} parent=0 // pred_check
    _
  $region35: #{graphsage_link_predictor.5} parent=0 // pred_check_branch
    %603 = sbr.rel (0) target = $region37
  $region36: #{graphsage_link_predictor.5} parent=0 // pred_region
    _
  $region37: #{graphsage_link_predictor.5} parent=0 // pred_fallthru
    _

// kernel: graphsage_link_predictor.3
$region0: #{graphsage_link_predictor.3}
  #allocation0 [shape = 'u32[]', space=smem, size = 0x4, offset = 0x4, fixed_abs, tag = 'smem constant byte address 0x4 - core index']
  #allocation1 [shape = 'u32[144,128]{1,0:T(1,128)}', space=vmem, size = 0x12000, scoped, tag = 'internal scratch']
  #allocation2 [shape = 'f32[128,128]{1,0:T(8,128)}', space=vmem, size = 0x10000, scoped, tag = 'scratch operand']
  %s0 = inlined_call_operand.vmem [shape: s8[128,128], index: 0, kind: input, shape index: {}]
  %s1 = inlined_call_operand.vmem [shape: bf16[128,128], index: 1, kind: input, shape index: {}, may-alias: {1,2}]
  %s2 = inlined_call_operand.vmem [shape: bf16[128,128], index: 2, kind: input, shape index: {}, may-alias: {1,2}]
  %s3 = inlined_call_operand.vmem [shape: f32[128,1], index: 3, kind: input, shape index: {}]
  %s4 = inlined_call_operand.vmem [shape: bf16[128,128], index: 4, kind: input, shape index: {}]
  %s5 = inlined_call_operand.vmem [shape: bf16[128,128], index: 5, kind: input, shape index: {}]
  %s6 = inlined_call_operand.vmem [shape: f32[1,128], index: 6, kind: input, shape index: {}]
  %s7 = inlined_call_operand.vmem [shape: bf16[128,128], index: 7, kind: input, shape index: {}]
  %s8 = inlined_call_operand.vmem [shape: bf16[128,128], index: 8, kind: input, shape index: {}]
  %s9 = inlined_call_operand.vmem [shape: f32[1,128], index: 9, kind: input, shape index: {}]
  %s10 = inlined_call_operand.vmem [shape: bf16[128,128], index: 10, kind: output, shape index: {0}]
  %s11 = inlined_call_operand.vmem [shape: bf16[128,128], index: 11, kind: output, shape index: {1}]
  %12 = xla_tuple %s10, %s11
  %s13 = sld [smem:[#allocation0]]
  $region66: #{graphsage_link_predictor.3} parent=0
    _
  %s15 = ssub.s32 1, %s13
  %s16 = scalar_select 0, %s15, %s13
  // Predicated region
  $region2: #{graphsage_link_predictor.3} parent=0 // pred_check
    _
  $region3: #{graphsage_link_predictor.3} parent=0 // pred_check_branch
    %18 = sbr.rel (0) target = $region5
  $region4: #{graphsage_link_predictor.3} parent=0 // pred_region
    _
  $region5: #{graphsage_link_predictor.3} parent=0 // pred_fallthru
    _
  // Predicated region
  $region6: #{graphsage_link_predictor.3} parent=0 // pred_check
    _
  $region7: #{graphsage_link_predictor.3} parent=0 // pred_check_branch
    %20 = sbr.rel (0) target = $region9
  $region8: #{graphsage_link_predictor.3} parent=0 // pred_region
    _
  $region9: #{graphsage_link_predictor.3} parent=0 // pred_fallthru
    _
  // Predicated region
  $region10: #{graphsage_link_predictor.3} parent=0 // pred_check
    _
  $region11: #{graphsage_link_predictor.3} parent=0 // pred_check_branch
    %22 = sbr.rel (0) target = $region13
  $region12: #{graphsage_link_predictor.3} parent=0 // pred_region
    _
  $region13: #{graphsage_link_predictor.3} parent=0 // pred_fallthru
    _
  // Predicated region
  $region14: #{graphsage_link_predictor.3} parent=0 // pred_check
    _
  $region15: #{graphsage_link_predictor.3} parent=0 // pred_check_branch
    %24 = sbr.rel (0) target = $region17
  $region16: #{graphsage_link_predictor.3} parent=0 // pred_region
    _
  $region17: #{graphsage_link_predictor.3} parent=0 // pred_fallthru
    _
  // Predicated region
  $region18: #{graphsage_link_predictor.3} parent=0 // pred_check
    _
  $region19: #{graphsage_link_predictor.3} parent=0 // pred_check_branch
    %26 = sbr.rel (0) target = $region21
  $region20: #{graphsage_link_predictor.3} parent=0 // pred_region
    _
  $region21: #{graphsage_link_predictor.3} parent=0 // pred_fallthru
    _
  // Predicated region
  $region22: #{graphsage_link_predictor.3} parent=0 // pred_check
    _
  $region23: #{graphsage_link_predictor.3} parent=0 // pred_check_branch
    %28 = sbr.rel (0) target = $region25
  $region24: #{graphsage_link_predictor.3} parent=0 // pred_region
    _
  $region25: #{graphsage_link_predictor.3} parent=0 // pred_fallthru
    _
  // Predicated region
  $region26: #{graphsage_link_predictor.3} parent=0 // pred_check
    _
  $region27: #{graphsage_link_predictor.3} parent=0 // pred_check_branch
    %30 = sbr.rel (0) target = $region29
  $region28: #{graphsage_link_predictor.3} parent=0 // pred_region
    _
  $region29: #{graphsage_link_predictor.3} parent=0 // pred_fallthru
    _
  // Predicated region
  $region30: #{graphsage_link_predictor.3} parent=0 // pred_check
    _
  $region31: #{graphsage_link_predictor.3} parent=0 // pred_check_branch
    %32 = sbr.rel (0) target = $region33
  $region32: #{graphsage_link_predictor.3} parent=0 // pred_region
    _
  $region33: #{graphsage_link_predictor.3} parent=0 // pred_fallthru
    _
  // Predicated region
  $region34: #{graphsage_link_predictor.3} parent=0 // pred_check
    _
  $region35: #{graphsage_link_predictor.3} parent=0 // pred_check_branch
    %34 = sbr.rel (0) target = $region37
  $region36: #{graphsage_link_predictor.3} parent=0 // pred_region
    _
  $region37: #{graphsage_link_predictor.3} parent=0 // pred_fallthru
    _
  // Predicated region
  $region38: #{graphsage_link_predictor.3} parent=0 // pred_check
    _
  $region39: #{graphsage_link_predictor.3} parent=0 // pred_check_branch
    %36 = sbr.rel (0) target = $region41
  $region40: #{graphsage_link_predictor.3} parent=0 // pred_region
    _
  $region41: #{graphsage_link_predictor.3} parent=0 // pred_fallthru
    _
  %p38 = scmp.eq.s32.totalorder 0, 0
  // Predicated region
  $region42: #{graphsage_link_predictor.3} parent=0 // pred_check
    %p39 = pneg %p38
  $region43: #{graphsage_link_predictor.3} parent=0 // pred_check_branch
    %41 = sbr.rel (%p39) target = $region45
  $region44: #{graphsage_link_predictor.3} parent=0 // pred_region
    %42 = vst [vmem:[#allocation2] sm:$0xff] 0.0
    %43 = vst [vmem:[#allocation2 + $0x8] sm:$0xff] 0.0
    %44 = vst [vmem:[#allocation2 + $0x10] sm:$0xff] 0.0
    %45 = vst [vmem:[#allocation2 + $0x18] sm:$0xff] 0.0
    %46 = vst [vmem:[#allocation2 + $0x20] sm:$0xff] 0.0
    %47 = vst [vmem:[#allocation2 + $0x28] sm:$0xff] 0.0
    %48 = vst [vmem:[#allocation2 + $0x30] sm:$0xff] 0.0
    %49 = vst [vmem:[#allocation2 + $0x38] sm:$0xff] 0.0
    %50 = vst [vmem:[#allocation2 + $0x40] sm:$0xff] 0.0
    %51 = vst [vmem:[#allocation2 + $0x48] sm:$0xff] 0.0
    %52 = vst [vmem:[#allocation2 + $0x50] sm:$0xff] 0.0
    %53 = vst [vmem:[#allocation2 + $0x58] sm:$0xff] 0.0
    %54 = vst [vmem:[#allocation2 + $0x60] sm:$0xff] 0.0
    %55 = vst [vmem:[#allocation2 + $0x68] sm:$0xff] 0.0
    %56 = vst [vmem:[#allocation2 + $0x70] sm:$0xff] 0.0
    %57 = vst [vmem:[#allocation2 + $0x78] sm:$0xff] 0.0
  $region45: #{graphsage_link_predictor.3} parent=0 // pred_fallthru
    _
  %v58 = vld [vmem:[#allocation2] sm:$0xff]
  %v59 = vld [vmem:[#allocation2 + $0x8] sm:$0xff]
  %v60 = vld [vmem:[#allocation2 + $0x10] sm:$0xff]
  %v61 = vld [vmem:[#allocation2 + $0x18] sm:$0xff]
  %v62 = vld [vmem:[#allocation2 + $0x20] sm:$0xff]
  %v63 = vld [vmem:[#allocation2 + $0x28] sm:$0xff]
  %v64 = vld [vmem:[#allocation2 + $0x30] sm:$0xff]
  %v65 = vld [vmem:[#allocation2 + $0x38] sm:$0xff]
  %v66 = vld [vmem:[#allocation2 + $0x40] sm:$0xff]
  %v67 = vld [vmem:[#allocation2 + $0x48] sm:$0xff]
  %v68 = vld [vmem:[#allocation2 + $0x50] sm:$0xff]
  %v69 = vld [vmem:[#allocation2 + $0x58] sm:$0xff]
  %v70 = vld [vmem:[#allocation2 + $0x60] sm:$0xff]
  %v71 = vld [vmem:[#allocation2 + $0x68] sm:$0xff]
  %v72 = vld [vmem:[#allocation2 + $0x70] sm:$0xff]
  %v73 = vld [vmem:[#allocation2 + $0x78] sm:$0xff]
  %v74 = vld [vmem:[%s0] sm:$0xff]
  %v75 = vld [vmem:[%s0 + $0x8] sm:$0xff]
  %v76 = vld [vmem:[%s0 + $0x10] sm:$0xff]
  %v77 = vld [vmem:[%s0 + $0x18] sm:$0xff]
  %v78 = vunpack.c.l.s8.bf16 %v74
  %v79 = vunpack.c.h.s8.bf16 %v74
  %v80 = vunpack.c.l.s8.bf16 %v75
  %v81 = vunpack.c.h.s8.bf16 %v75
  %v82 = vunpack.c.l.s8.bf16 %v76
  %v83 = vunpack.c.h.s8.bf16 %v76
  %v84 = vunpack.c.l.s8.bf16 %v77
  %v85 = vunpack.c.h.s8.bf16 %v77
  %v86 = vld [vmem:[%s1] sm:$0xf]
  %v87 = vld [vmem:[%s1 + $0x4] sm:$0xf]
  %v88 = vld [vmem:[%s1 + $0x8] sm:$0xf]
  %v89 = vld [vmem:[%s1 + $0xc] sm:$0xf]
  %v90 = vld [vmem:[%s1 + $0x10] sm:$0xf]
  %v91 = vld [vmem:[%s1 + $0x14] sm:$0xf]
  %v92 = vld [vmem:[%s1 + $0x18] sm:$0xf]
  %v93 = vld [vmem:[%s1 + $0x1c] sm:$0xf]
  %v94 = vld [vmem:[%s1 + $0x20] sm:$0xf]
  %v95 = vld [vmem:[%s1 + $0x24] sm:$0xf]
  %v96 = vld [vmem:[%s1 + $0x28] sm:$0xf]
  %v97 = vld [vmem:[%s1 + $0x2c] sm:$0xf]
  %v98 = vld [vmem:[%s1 + $0x30] sm:$0xf]
  %v99 = vld [vmem:[%s1 + $0x34] sm:$0xf]
  %v100 = vld [vmem:[%s1 + $0x38] sm:$0xf]
  %v101 = vld [vmem:[%s1 + $0x3c] sm:$0xf]
  %v118 = vunpack.c.l.b16 %v86
  %v119 = vunpack.c.l.b16 %v87
  %v120 = vunpack.c.l.b16 %v88
  %v121 = vunpack.c.l.b16 %v89
  %v122 = vunpack.c.l.b16 %v90
  %v123 = vunpack.c.l.b16 %v91
  %v124 = vunpack.c.l.b16 %v92
  %v125 = vunpack.c.l.b16 %v93
  %v126 = vunpack.c.l.b16 %v94
  %v127 = vunpack.c.l.b16 %v95
  %v128 = vunpack.c.l.b16 %v96
  %v129 = vunpack.c.l.b16 %v97
  %v130 = vunpack.c.l.b16 %v98
  %v131 = vunpack.c.l.b16 %v99
  %v132 = vunpack.c.l.b16 %v100
  %v133 = vunpack.c.l.b16 %v101
  %v134 = vpack.c.b16 %v119, %v118
  %v135 = vpack.c.b16 %v121, %v120
  %v136 = vpack.c.b16 %v123, %v122
  %v137 = vpack.c.b16 %v125, %v124
  %v138 = vpack.c.b16 %v127, %v126
  %v139 = vpack.c.b16 %v129, %v128
  %v140 = vpack.c.b16 %v131, %v130
  %v141 = vpack.c.b16 %v133, %v132
  %150 = vmatprep.subr.bf16.mxu0 0
  %151 = vmatpush1.bf16.msra.mxu0 %v134
  %152 = vmatprep.subr.bf16.mxu0 0
  %153 = vmatpush1.bf16.msra.mxu0 %v135
  %154 = vmatprep.subr.bf16.mxu0 0
  %155 = vmatpush1.bf16.msra.mxu0 %v136
  %156 = vmatprep.subr.bf16.mxu0 0
  %157 = vmatpush1.bf16.msra.mxu0 %v137
  %158 = vmatprep.subr.bf16.mxu0 0
  %159 = vmatpush1.bf16.msra.mxu0 %v138
  %160 = vmatprep.subr.bf16.mxu0 0
  %161 = vmatpush1.bf16.msra.mxu0 %v139
  %162 = vmatprep.subr.bf16.mxu0 0
  %163 = vmatpush1.bf16.msra.mxu0 %v140
  %164 = vmatprep.subr.bf16.mxu0 0
  %165 = vmatpush1.bf16.msra.mxu0 %v141
  %166 = vmatprep.subr.bf16.mxu0 0
  %167 = vmatpush1.bf16.msra.mxu0 0
  %168 = vmatprep.subr.bf16.mxu0 0
  %169 = vmatpush1.bf16.msra.mxu0 0
  %170 = vmatprep.subr.bf16.mxu0 0
  %171 = vmatpush1.bf16.msra.mxu0 0
  %172 = vmatprep.subr.bf16.mxu0 0
  %173 = vmatpush1.bf16.msra.mxu0 0
  %174 = vmatprep.subr.bf16.mxu0 0
  %175 = vmatpush1.bf16.msra.mxu0 0
  %176 = vmatprep.subr.bf16.mxu0 0
  %177 = vmatpush1.bf16.msra.mxu0 0
  %178 = vmatprep.subr.bf16.mxu0 0
  %179 = vmatpush1.bf16.msra.mxu0 0
  %180 = vmatprep.subr.bf16.mxu0 0
  %181 = vmatpush1.bf16.msra.mxu0 0
  %182 = vmatprep.mubr.bf16.mxu0 0
  %183 = vmatmul.mubr.bf16.gmra.mrb[0].mxu0 %v78
  %v184 = vpop.f32.mrb[0].mxu0
  %v185 = vadd.f32 0.0, %v184
  %v186 = vpop.f32.mrb[0].mxu0
  %v187 = vpop.f32.mrb[0].mxu0
  %v188 = vadd.f32 0.0, %v187
  %v189 = vpop.f32.mrb[0].mxu0
  %190 = vmatprep.mubr.bf16.mxu0 0
  %191 = vmatmul.mubr.bf16.gmra.mrb[0].mxu0 %v79
  %v192 = vpop.f32.mrb[0].mxu0
  %v193 = vadd.f32 0.0, %v192
  %v194 = vpop.f32.mrb[0].mxu0
  %v195 = vpop.f32.mrb[0].mxu0
  %v196 = vadd.f32 0.0, %v195
  %v197 = vpop.f32.mrb[0].mxu0
  %198 = vmatprep.mubr.bf16.mxu0 0
  %199 = vmatmul.mubr.bf16.gmra.mrb[0].mxu0 %v80
  %v200 = vpop.f32.mrb[0].mxu0
  %v201 = vadd.f32 0.0, %v200
  %v202 = vpop.f32.mrb[0].mxu0
  %v203 = vpop.f32.mrb[0].mxu0
  %v204 = vadd.f32 0.0, %v203
  %v205 = vpop.f32.mrb[0].mxu0
  %206 = vmatprep.mubr.bf16.mxu0 0
  %207 = vmatmul.mubr.bf16.gmra.mrb[0].mxu0 %v81
  %v208 = vpop.f32.mrb[0].mxu0
  %v209 = vadd.f32 0.0, %v208
  %v210 = vpop.f32.mrb[0].mxu0
  %v211 = vpop.f32.mrb[0].mxu0
  %v212 = vadd.f32 0.0, %v211
  %v213 = vpop.f32.mrb[0].mxu0
  %214 = vmatprep.mubr.bf16.mxu0 0
  %215 = vmatmul.mubr.bf16.gmra.mrb[0].mxu0 %v82
  %v216 = vpop.f32.mrb[0].mxu0
  %v217 = vadd.f32 0.0, %v216
  %v218 = vpop.f32.mrb[0].mxu0
  %v219 = vpop.f32.mrb[0].mxu0
  %v220 = vadd.f32 0.0, %v219
  %v221 = vpop.f32.mrb[0].mxu0
  %222 = vmatprep.mubr.bf16.mxu0 0
  %223 = vmatmul.mubr.bf16.gmra.mrb[0].mxu0 %v83
  %v224 = vpop.f32.mrb[0].mxu0
  %v225 = vadd.f32 0.0, %v224
  %v226 = vpop.f32.mrb[0].mxu0
  %v227 = vpop.f32.mrb[0].mxu0
  %v228 = vadd.f32 0.0, %v227
  %v229 = vpop.f32.mrb[0].mxu0
  %230 = vmatprep.mubr.bf16.mxu0 0
  %231 = vmatmul.mubr.bf16.gmra.mrb[0].mxu0 %v84
  %v232 = vpop.f32.mrb[0].mxu0
  %v233 = vadd.f32 0.0, %v232
  %v234 = vpop.f32.mrb[0].mxu0
  %v235 = vpop.f32.mrb[0].mxu0
  %v236 = vadd.f32 0.0, %v235
  %v237 = vpop.f32.mrb[0].mxu0
  %238 = vmatprep.mubr.bf16.mxu0 0
  %239 = vmatmul.mubr.bf16.gmra.mrb[0].mxu0 %v85
  %v240 = vpop.f32.mrb[0].mxu0
  %v241 = vadd.f32 0.0, %v240
  %v242 = vpop.f32.mrb[0].mxu0
  %v243 = vpop.f32.mrb[0].mxu0
  %v244 = vadd.f32 0.0, %v243
  %v245 = vpop.f32.mrb[0].mxu0
  %246 = vdwg.mxu0
  %v247 = vadd.f32 %v58, %v185
  %v248 = vadd.f32 %v59, %v188
  %v249 = vadd.f32 %v60, %v193
  %v250 = vadd.f32 %v61, %v196
  %v251 = vadd.f32 %v62, %v201
  %v252 = vadd.f32 %v63, %v204
  %v253 = vadd.f32 %v64, %v209
  %v254 = vadd.f32 %v65, %v212
  %v255 = vadd.f32 %v66, %v217
  %v256 = vadd.f32 %v67, %v220
  %v257 = vadd.f32 %v68, %v225
  %v258 = vadd.f32 %v69, %v228
  %v259 = vadd.f32 %v70, %v233
  %v260 = vadd.f32 %v71, %v236
  %v261 = vadd.f32 %v72, %v241
  %v262 = vadd.f32 %v73, %v244
  %263 = vst [vmem:[#allocation2] sm:$0xff] %v247
  %264 = vst [vmem:[#allocation2 + $0x8] sm:$0xff] %v248
  %265 = vst [vmem:[#allocation2 + $0x10] sm:$0xff] %v249
  %266 = vst [vmem:[#allocation2 + $0x18] sm:$0xff] %v250
  %267 = vst [vmem:[#allocation2 + $0x20] sm:$0xff] %v251
  %268 = vst [vmem:[#allocation2 + $0x28] sm:$0xff] %v252
  %269 = vst [vmem:[#allocation2 + $0x30] sm:$0xff] %v253
  %270 = vst [vmem:[#allocation2 + $0x38] sm:$0xff] %v254
  %271 = vst [vmem:[#allocation2 + $0x40] sm:$0xff] %v255
  %272 = vst [vmem:[#allocation2 + $0x48] sm:$0xff] %v256
  %273 = vst [vmem:[#allocation2 + $0x50] sm:$0xff] %v257
  %274 = vst [vmem:[#allocation2 + $0x58] sm:$0xff] %v258
  %275 = vst [vmem:[#allocation2 + $0x60] sm:$0xff] %v259
  %276 = vst [vmem:[#allocation2 + $0x68] sm:$0xff] %v260
  %277 = vst [vmem:[#allocation2 + $0x70] sm:$0xff] %v261
  %278 = vst [vmem:[#allocation2 + $0x78] sm:$0xff] %v262
  // Predicated region
  $region46: #{graphsage_link_predictor.3} parent=0 // pred_check
    %p279 = pneg %p38
  $region47: #{graphsage_link_predictor.3} parent=0 // pred_check_branch
    %281 = sbr.rel (%p279) target = $region49
  $region48: #{graphsage_link_predictor.3} parent=0 // pred_region
    %v282 = vld [vmem:[#allocation2] sm:$0xff]
    %v283 = vld [vmem:[#allocation2 + $0x8] sm:$0xff]
    %v284 = vld [vmem:[#allocation2 + $0x10] sm:$0xff]
    %v285 = vld [vmem:[#allocation2 + $0x18] sm:$0xff]
    %v286 = vld [vmem:[#allocation2 + $0x20] sm:$0xff]
    %v287 = vld [vmem:[#allocation2 + $0x28] sm:$0xff]
    %v288 = vld [vmem:[#allocation2 + $0x30] sm:$0xff]
    %v289 = vld [vmem:[#allocation2 + $0x38] sm:$0xff]
    %v290 = vld [vmem:[#allocation2 + $0x40] sm:$0xff]
    %v291 = vld [vmem:[#allocation2 + $0x48] sm:$0xff]
    %v292 = vld [vmem:[#allocation2 + $0x50] sm:$0xff]
    %v293 = vld [vmem:[#allocation2 + $0x58] sm:$0xff]
    %v294 = vld [vmem:[#allocation2 + $0x60] sm:$0xff]
    %v295 = vld [vmem:[#allocation2 + $0x68] sm:$0xff]
    %v296 = vld [vmem:[#allocation2 + $0x70] sm:$0xff]
    %v297 = vld [vmem:[#allocation2 + $0x78] sm:$0xff]
    %v298 = vld [vmem:[%s3] sm:$0xff]
    %v299 = vld [vmem:[%s3 + $0x8] sm:$0xff]
    %v300 = vld [vmem:[%s3 + $0x10] sm:$0xff]
    %v301 = vld [vmem:[%s3 + $0x18] sm:$0xff]
    %v302 = vld [vmem:[%s3 + $0x20] sm:$0xff]
    %v303 = vld [vmem:[%s3 + $0x28] sm:$0xff]
    %v304 = vld [vmem:[%s3 + $0x30] sm:$0xff]
    %v305 = vld [vmem:[%s3 + $0x38] sm:$0xff]
    %v306 = vld [vmem:[%s3 + $0x40] sm:$0xff]
    %v307 = vld [vmem:[%s3 + $0x48] sm:$0xff]
    %v308 = vld [vmem:[%s3 + $0x50] sm:$0xff]
    %v309 = vld [vmem:[%s3 + $0x58] sm:$0xff]
    %v310 = vld [vmem:[%s3 + $0x60] sm:$0xff]
    %v311 = vld [vmem:[%s3 + $0x68] sm:$0xff]
    %v312 = vld [vmem:[%s3 + $0x70] sm:$0xff]
    %v313 = vld [vmem:[%s3 + $0x78] sm:$0xff]
    %315 = vset.pattern.permute.xlu0 0
    %316 = vperm.xlu0 %315, %v298
    %v317 = vpop.permute.xlu0 %316
    %320 = vset.pattern.permute.xlu0 0
    %321 = vperm.xlu0 %320, %v299
    %v322 = vpop.permute.xlu0 %321
    %325 = vset.pattern.permute.xlu0 0
    %326 = vperm.xlu0 %325, %v300
    %v327 = vpop.permute.xlu0 %326
    %330 = vset.pattern.permute.xlu0 0
    %331 = vperm.xlu0 %330, %v301
    %v332 = vpop.permute.xlu0 %331
    %335 = vset.pattern.permute.xlu0 0
    %336 = vperm.xlu0 %335, %v302
    %v337 = vpop.permute.xlu0 %336
    %340 = vset.pattern.permute.xlu0 0
    %341 = vperm.xlu0 %340, %v303
    %v342 = vpop.permute.xlu0 %341
    %345 = vset.pattern.permute.xlu0 0
    %346 = vperm.xlu0 %345, %v304
    %v347 = vpop.permute.xlu0 %346
    %350 = vset.pattern.permute.xlu0 0
    %351 = vperm.xlu0 %350, %v305
    %v352 = vpop.permute.xlu0 %351
    %355 = vset.pattern.permute.xlu0 0
    %356 = vperm.xlu0 %355, %v306
    %v357 = vpop.permute.xlu0 %356
    %360 = vset.pattern.permute.xlu0 0
    %361 = vperm.xlu0 %360, %v307
    %v362 = vpop.permute.xlu0 %361
    %365 = vset.pattern.permute.xlu0 0
    %366 = vperm.xlu0 %365, %v308
    %v367 = vpop.permute.xlu0 %366
    %370 = vset.pattern.permute.xlu0 0
    %371 = vperm.xlu0 %370, %v309
    %v372 = vpop.permute.xlu0 %371
    %375 = vset.pattern.permute.xlu0 0
    %376 = vperm.xlu0 %375, %v310
    %v377 = vpop.permute.xlu0 %376
    %380 = vset.pattern.permute.xlu0 0
    %381 = vperm.xlu0 %380, %v311
    %v382 = vpop.permute.xlu0 %381
    %385 = vset.pattern.permute.xlu0 0
    %386 = vperm.xlu0 %385, %v312
    %v387 = vpop.permute.xlu0 %386
    %390 = vset.pattern.permute.xlu0 0
    %391 = vperm.xlu0 %390, %v313
    %v392 = vpop.permute.xlu0 %391
    %v394 = vmul.f32 %v282, %v317
    %v395 = vmul.f32 %v283, %v322
    %v396 = vmul.f32 %v284, %v327
    %v397 = vmul.f32 %v285, %v332
    %v398 = vmul.f32 %v286, %v337
    %v399 = vmul.f32 %v287, %v342
    %v400 = vmul.f32 %v288, %v347
    %v401 = vmul.f32 %v289, %v352
    %v402 = vmul.f32 %v290, %v357
    %v403 = vmul.f32 %v291, %v362
    %v404 = vmul.f32 %v292, %v367
    %v405 = vmul.f32 %v293, %v372
    %v406 = vmul.f32 %v294, %v377
    %v407 = vmul.f32 %v295, %v382
    %v408 = vmul.f32 %v296, %v387
    %v409 = vmul.f32 %v297, %v392
    %v410 = vpack.c.bf16 %v395, %v394
    %v411 = vpack.c.bf16 %v397, %v396
    %v412 = vpack.c.bf16 %v399, %v398
    %v413 = vpack.c.bf16 %v401, %v400
    %v414 = vpack.c.bf16 %v403, %v402
    %v415 = vpack.c.bf16 %v405, %v404
    %v416 = vpack.c.bf16 %v407, %v406
    %v417 = vpack.c.bf16 %v409, %v408
    %v418 = vld [vmem:[%s4] sm:$0xf]
    %v419 = vld [vmem:[%s4 + $0x4] sm:$0xf]
    %v420 = vld [vmem:[%s4 + $0x8] sm:$0xf]
    %v421 = vld [vmem:[%s4 + $0xc] sm:$0xf]
    %v422 = vld [vmem:[%s4 + $0x10] sm:$0xf]
    %v423 = vld [vmem:[%s4 + $0x14] sm:$0xf]
    %v424 = vld [vmem:[%s4 + $0x18] sm:$0xf]
    %v425 = vld [vmem:[%s4 + $0x1c] sm:$0xf]
    %v426 = vld [vmem:[%s4 + $0x20] sm:$0xf]
    %v427 = vld [vmem:[%s4 + $0x24] sm:$0xf]
    %v428 = vld [vmem:[%s4 + $0x28] sm:$0xf]
    %v429 = vld [vmem:[%s4 + $0x2c] sm:$0xf]
    %v430 = vld [vmem:[%s4 + $0x30] sm:$0xf]
    %v431 = vld [vmem:[%s4 + $0x34] sm:$0xf]
    %v432 = vld [vmem:[%s4 + $0x38] sm:$0xf]
    %v433 = vld [vmem:[%s4 + $0x3c] sm:$0xf]
    %v434 = vld [vmem:[%s2] sm:$0xf]
    %v435 = vld [vmem:[%s2 + $0x4] sm:$0xf]
    %v436 = vld [vmem:[%s2 + $0x8] sm:$0xf]
    %v437 = vld [vmem:[%s2 + $0xc] sm:$0xf]
    %v438 = vld [vmem:[%s2 + $0x10] sm:$0xf]
    %v439 = vld [vmem:[%s2 + $0x14] sm:$0xf]
    %v440 = vld [vmem:[%s2 + $0x18] sm:$0xf]
    %v441 = vld [vmem:[%s2 + $0x1c] sm:$0xf]
    %v442 = vld [vmem:[%s2 + $0x20] sm:$0xf]
    %v443 = vld [vmem:[%s2 + $0x24] sm:$0xf]
    %v444 = vld [vmem:[%s2 + $0x28] sm:$0xf]
    %v445 = vld [vmem:[%s2 + $0x2c] sm:$0xf]
    %v446 = vld [vmem:[%s2 + $0x30] sm:$0xf]
    %v447 = vld [vmem:[%s2 + $0x34] sm:$0xf]
    %v448 = vld [vmem:[%s2 + $0x38] sm:$0xf]
    %v449 = vld [vmem:[%s2 + $0x3c] sm:$0xf]
    %v450 = vld [vmem:[%s5] sm:$0xf]
    %v451 = vld [vmem:[%s5 + $0x4] sm:$0xf]
    %v452 = vld [vmem:[%s5 + $0x8] sm:$0xf]
    %v453 = vld [vmem:[%s5 + $0xc] sm:$0xf]
    %v454 = vld [vmem:[%s5 + $0x10] sm:$0xf]
    %v455 = vld [vmem:[%s5 + $0x14] sm:$0xf]
    %v456 = vld [vmem:[%s5 + $0x18] sm:$0xf]
    %v457 = vld [vmem:[%s5 + $0x1c] sm:$0xf]
    %v458 = vld [vmem:[%s5 + $0x20] sm:$0xf]
    %v459 = vld [vmem:[%s5 + $0x24] sm:$0xf]
    %v460 = vld [vmem:[%s5 + $0x28] sm:$0xf]
    %v461 = vld [vmem:[%s5 + $0x2c] sm:$0xf]
    %v462 = vld [vmem:[%s5 + $0x30] sm:$0xf]
    %v463 = vld [vmem:[%s5 + $0x34] sm:$0xf]
    %v464 = vld [vmem:[%s5 + $0x38] sm:$0xf]
    %v465 = vld [vmem:[%s5 + $0x3c] sm:$0xf]
    %v482 = vunpack.c.l.b16 %v434
    %v483 = vunpack.c.l.b16 %v435
    %v484 = vunpack.c.l.b16 %v436
    %v485 = vunpack.c.l.b16 %v437
    %v486 = vunpack.c.l.b16 %v438
    %v487 = vunpack.c.l.b16 %v439
    %v488 = vunpack.c.l.b16 %v440
    %v489 = vunpack.c.l.b16 %v441
    %v490 = vunpack.c.l.b16 %v442
    %v491 = vunpack.c.l.b16 %v443
    %v492 = vunpack.c.l.b16 %v444
    %v493 = vunpack.c.l.b16 %v445
    %v494 = vunpack.c.l.b16 %v446
    %v495 = vunpack.c.l.b16 %v447
    %v496 = vunpack.c.l.b16 %v448
    %v497 = vunpack.c.l.b16 %v449
    %v498 = vpack.c.b16 %v483, %v482
    %v499 = vpack.c.b16 %v485, %v484
    %v500 = vpack.c.b16 %v487, %v486
    %v501 = vpack.c.b16 %v489, %v488
    %v502 = vpack.c.b16 %v491, %v490
    %v503 = vpack.c.b16 %v493, %v492
    %v504 = vpack.c.b16 %v495, %v494
    %v505 = vpack.c.b16 %v497, %v496
    %v530 = vunpack.c.l.b16 %v450
    %v531 = vunpack.c.l.b16 %v451
    %v532 = vunpack.c.l.b16 %v452
    %v533 = vunpack.c.l.b16 %v453
    %v534 = vunpack.c.l.b16 %v454
    %v535 = vunpack.c.l.b16 %v455
    %v536 = vunpack.c.l.b16 %v456
    %v537 = vunpack.c.l.b16 %v457
    %v538 = vunpack.c.l.b16 %v458
    %v539 = vunpack.c.l.b16 %v459
    %v540 = vunpack.c.l.b16 %v460
    %v541 = vunpack.c.l.b16 %v461
    %v542 = vunpack.c.l.b16 %v462
    %v543 = vunpack.c.l.b16 %v463
    %v544 = vunpack.c.l.b16 %v464
    %v545 = vunpack.c.l.b16 %v465
    %v546 = vpack.c.b16 %v531, %v530
    %v547 = vpack.c.b16 %v533, %v532
    %v548 = vpack.c.b16 %v535, %v534
    %v549 = vpack.c.b16 %v537, %v536
    %v550 = vpack.c.b16 %v539, %v538
    %v551 = vpack.c.b16 %v541, %v540
    %v552 = vpack.c.b16 %v543, %v542
    %v553 = vpack.c.b16 %v545, %v544
    %562 = vmatprep.subr.bf16.mxu0 0
    %563 = vmatpush1.bf16.msra.mxu0 %v546
    %564 = vmatprep.subr.bf16.mxu0 0
    %565 = vmatpush1.bf16.msra.mxu0 %v547
    %566 = vmatprep.subr.bf16.mxu0 0
    %567 = vmatpush1.bf16.msra.mxu0 %v548
    %568 = vmatprep.subr.bf16.mxu0 0
    %569 = vmatpush1.bf16.msra.mxu0 %v549
    %570 = vmatprep.subr.bf16.mxu0 0
    %571 = vmatpush1.bf16.msra.mxu0 %v550
    %572 = vmatprep.subr.bf16.mxu0 0
    %573 = vmatpush1.bf16.msra.mxu0 %v551
    %574 = vmatprep.subr.bf16.mxu0 0
    %575 = vmatpush1.bf16.msra.mxu0 %v552
    %576 = vmatprep.subr.bf16.mxu0 0
    %577 = vmatpush1.bf16.msra.mxu0 %v553
    %578 = vmatprep.subr.bf16.mxu0 0
    %579 = vmatpush1.bf16.msra.mxu0 0
    %580 = vmatprep.subr.bf16.mxu0 0
    %581 = vmatpush1.bf16.msra.mxu0 0
    %582 = vmatprep.subr.bf16.mxu0 0
    %583 = vmatpush1.bf16.msra.mxu0 0
    %584 = vmatprep.subr.bf16.mxu0 0
    %585 = vmatpush1.bf16.msra.mxu0 0
    %586 = vmatprep.subr.bf16.mxu0 0
    %587 = vmatpush1.bf16.msra.mxu0 0
    %588 = vmatprep.subr.bf16.mxu0 0
    %589 = vmatpush1.bf16.msra.mxu0 0
    %590 = vmatprep.subr.bf16.mxu0 0
    %591 = vmatpush1.bf16.msra.mxu0 0
    %592 = vmatprep.subr.bf16.mxu0 0
    %593 = vmatpush1.bf16.msra.mxu0 0
    %594 = vmatprep.mubr.bf16.mxu0 0
    %595 = vmatmul.mubr.bf16.gmra.mrb[0].mxu0 %v498
    %v596 = vpop.f32.mrb[0].mxu0
    %v597 = vadd.f32 0.0, %v596
    %v598 = vpop.f32.mrb[0].mxu0
    %v599 = vpop.f32.mrb[0].mxu0
    %v600 = vadd.f32 0.0, %v599
    %v601 = vpop.f32.mrb[0].mxu0
    %602 = vmatprep.mubr.bf16.mxu0 0
    %603 = vmatmul.mubr.bf16.gmra.mrb[0].mxu0 %v499
    %v604 = vpop.f32.mrb[0].mxu0
    %v605 = vadd.f32 0.0, %v604
    %v606 = vpop.f32.mrb[0].mxu0
    %v607 = vpop.f32.mrb[0].mxu0
    %v608 = vadd.f32 0.0, %v607
    %v609 = vpop.f32.mrb[0].mxu0
    %610 = vmatprep.mubr.bf16.mxu0 0
    %611 = vmatmul.mubr.bf16.gmra.mrb[0].mxu0 %v500
    %v612 = vpop.f32.mrb[0].mxu0
    %v613 = vadd.f32 0.0, %v612
    %v614 = vpop.f32.mrb[0].mxu0
    %v615 = vpop.f32.mrb[0].mxu0
    %v616 = vadd.f32 0.0, %v615
    %v617 = vpop.f32.mrb[0].mxu0
    %618 = vmatprep.mubr.bf16.mxu0 0
    %619 = vmatmul.mubr.bf16.gmra.mrb[0].mxu0 %v501
    %v620 = vpop.f32.mrb[0].mxu0
    %v621 = vadd.f32 0.0, %v620
    %v622 = vpop.f32.mrb[0].mxu0
    %v623 = vpop.f32.mrb[0].mxu0
    %v624 = vadd.f32 0.0, %v623
    %v625 = vpop.f32.mrb[0].mxu0
    %626 = vmatprep.mubr.bf16.mxu0 0
    %627 = vmatmul.mubr.bf16.gmra.mrb[0].mxu0 %v502
    %v628 = vpop.f32.mrb[0].mxu0
    %v629 = vadd.f32 0.0, %v628
    %v630 = vpop.f32.mrb[0].mxu0
    %v631 = vpop.f32.mrb[0].mxu0
    %v632 = vadd.f32 0.0, %v631
    %v633 = vpop.f32.mrb[0].mxu0
    %634 = vmatprep.mubr.bf16.mxu0 0
    %635 = vmatmul.mubr.bf16.gmra.mrb[0].mxu0 %v503
    %v636 = vpop.f32.mrb[0].mxu0
    %v637 = vadd.f32 0.0, %v636
    %v638 = vpop.f32.mrb[0].mxu0
    %v639 = vpop.f32.mrb[0].mxu0
    %v640 = vadd.f32 0.0, %v639
    %v641 = vpop.f32.mrb[0].mxu0
    %642 = vmatprep.mubr.bf16.mxu0 0
    %643 = vmatmul.mubr.bf16.gmra.mrb[0].mxu0 %v504
    %v644 = vpop.f32.mrb[0].mxu0
    %v645 = vadd.f32 0.0, %v644
    %v646 = vpop.f32.mrb[0].mxu0
    %v647 = vpop.f32.mrb[0].mxu0
    %v648 = vadd.f32 0.0, %v647
    %v649 = vpop.f32.mrb[0].mxu0
    %650 = vmatprep.mubr.bf16.mxu0 0
    %651 = vmatmul.mubr.bf16.gmra.mrb[0].mxu0 %v505
    %v652 = vpop.f32.mrb[0].mxu0
    %v653 = vadd.f32 0.0, %v652
    %v654 = vpop.f32.mrb[0].mxu0
    %v655 = vpop.f32.mrb[0].mxu0
    %v656 = vadd.f32 0.0, %v655
    %v657 = vpop.f32.mrb[0].mxu0
    %658 = vdwg.mxu0
    %v675 = vunpack.c.l.b16 %v418
    %v676 = vunpack.c.l.b16 %v419
    %v677 = vunpack.c.l.b16 %v420
    %v678 = vunpack.c.l.b16 %v421
    %v679 = vunpack.c.l.b16 %v422
    %v680 = vunpack.c.l.b16 %v423
    %v681 = vunpack.c.l.b16 %v424
    %v682 = vunpack.c.l.b16 %v425
    %v683 = vunpack.c.l.b16 %v426
    %v684 = vunpack.c.l.b16 %v427
    %v685 = vunpack.c.l.b16 %v428
    %v686 = vunpack.c.l.b16 %v429
    %v687 = vunpack.c.l.b16 %v430
    %v688 = vunpack.c.l.b16 %v431
    %v689 = vunpack.c.l.b16 %v432
    %v690 = vunpack.c.l.b16 %v433
    %v691 = vpack.c.b16 %v676, %v675
    %v692 = vpack.c.b16 %v678, %v677
    %v693 = vpack.c.b16 %v680, %v679
    %v694 = vpack.c.b16 %v682, %v681
    %v695 = vpack.c.b16 %v684, %v683
    %v696 = vpack.c.b16 %v686, %v685
    %v697 = vpack.c.b16 %v688, %v687
    %v698 = vpack.c.b16 %v690, %v689
    %707 = vmatprep.subr.bf16.mxu0 0
    %708 = vmatpush1.bf16.msra.mxu0 %v691
    %709 = vmatprep.subr.bf16.mxu0 0
    %710 = vmatpush1.bf16.msra.mxu0 %v692
    %711 = vmatprep.subr.bf16.mxu0 0
    %712 = vmatpush1.bf16.msra.mxu0 %v693
    %713 = vmatprep.subr.bf16.mxu0 0
    %714 = vmatpush1.bf16.msra.mxu0 %v694
    %715 = vmatprep.subr.bf16.mxu0 0
    %716 = vmatpush1.bf16.msra.mxu0 %v695
    %717 = vmatprep.subr.bf16.mxu0 0
    %718 = vmatpush1.bf16.msra.mxu0 %v696
    %719 = vmatprep.subr.bf16.mxu0 0
    %720 = vmatpush1.bf16.msra.mxu0 %v697
    %721 = vmatprep.subr.bf16.mxu0 0
    %722 = vmatpush1.bf16.msra.mxu0 %v698
    %723 = vmatprep.subr.bf16.mxu0 0
    %724 = vmatpush1.bf16.msra.mxu0 0
    %725 = vmatprep.subr.bf16.mxu0 0
    %726 = vmatpush1.bf16.msra.mxu0 0
    %727 = vmatprep.subr.bf16.mxu0 0
    %728 = vmatpush1.bf16.msra.mxu0 0
    %729 = vmatprep.subr.bf16.mxu0 0
    %730 = vmatpush1.bf16.msra.mxu0 0
    %731 = vmatprep.subr.bf16.mxu0 0
    %732 = vmatpush1.bf16.msra.mxu0 0
    %733 = vmatprep.subr.bf16.mxu0 0
    %734 = vmatpush1.bf16.msra.mxu0 0
    %735 = vmatprep.subr.bf16.mxu0 0
    %736 = vmatpush1.bf16.msra.mxu0 0
    %737 = vmatprep.subr.bf16.mxu0 0
    %738 = vmatpush1.bf16.msra.mxu0 0
    %739 = vmatprep.mubr.bf16.mxu0 0
    %740 = vmatmul.mubr.bf16.gmra.mrb[0].mxu0 %v410
    %v741 = vpop.f32.mrb[0].mxu0
    %v742 = vadd.f32 %v597, %v741
    %v743 = vpop.f32.mrb[0].mxu0
    %v744 = vpop.f32.mrb[0].mxu0
    %v745 = vadd.f32 %v600, %v744
    %v746 = vpop.f32.mrb[0].mxu0
    %747 = vmatprep.mubr.bf16.mxu0 0
    %748 = vmatmul.mubr.bf16.gmra.mrb[0].mxu0 %v411
    %v749 = vpop.f32.mrb[0].mxu0
    %v750 = vadd.f32 %v605, %v749
    %v751 = vpop.f32.mrb[0].mxu0
    %v752 = vpop.f32.mrb[0].mxu0
    %v753 = vadd.f32 %v608, %v752
    %v754 = vpop.f32.mrb[0].mxu0
    %755 = vmatprep.mubr.bf16.mxu0 0
    %756 = vmatmul.mubr.bf16.gmra.mrb[0].mxu0 %v412
    %v757 = vpop.f32.mrb[0].mxu0
    %v758 = vadd.f32 %v613, %v757
    %v759 = vpop.f32.mrb[0].mxu0
    %v760 = vpop.f32.mrb[0].mxu0
    %v761 = vadd.f32 %v616, %v760
    %v762 = vpop.f32.mrb[0].mxu0
    %763 = vmatprep.mubr.bf16.mxu0 0
    %764 = vmatmul.mubr.bf16.gmra.mrb[0].mxu0 %v413
    %v765 = vpop.f32.mrb[0].mxu0
    %v766 = vadd.f32 %v621, %v765
    %v767 = vpop.f32.mrb[0].mxu0
    %v768 = vpop.f32.mrb[0].mxu0
    %v769 = vadd.f32 %v624, %v768
    %v770 = vpop.f32.mrb[0].mxu0
    %771 = vmatprep.mubr.bf16.mxu0 0
    %772 = vmatmul.mubr.bf16.gmra.mrb[0].mxu0 %v414
    %v773 = vpop.f32.mrb[0].mxu0
    %v774 = vadd.f32 %v629, %v773
    %v775 = vpop.f32.mrb[0].mxu0
    %v776 = vpop.f32.mrb[0].mxu0
    %v777 = vadd.f32 %v632, %v776
    %v778 = vpop.f32.mrb[0].mxu0
    %779 = vmatprep.mubr.bf16.mxu0 0
    %780 = vmatmul.mubr.bf16.gmra.mrb[0].mxu0 %v415
    %v781 = vpop.f32.mrb[0].mxu0
    %v782 = vadd.f32 %v637, %v781
    %v783 = vpop.f32.mrb[0].mxu0
    %v784 = vpop.f32.mrb[0].mxu0
    %v785 = vadd.f32 %v640, %v784
    %v786 = vpop.f32.mrb[0].mxu0
    %787 = vmatprep.mubr.bf16.mxu0 0
    %788 = vmatmul.mubr.bf16.gmra.mrb[0].mxu0 %v416
    %v789 = vpop.f32.mrb[0].mxu0
    %v790 = vadd.f32 %v645, %v789
    %v791 = vpop.f32.mrb[0].mxu0
    %v792 = vpop.f32.mrb[0].mxu0
    %v793 = vadd.f32 %v648, %v792
    %v794 = vpop.f32.mrb[0].mxu0
    %795 = vmatprep.mubr.bf16.mxu0 0
    %796 = vmatmul.mubr.bf16.gmra.mrb[0].mxu0 %v417
    %v797 = vpop.f32.mrb[0].mxu0
    %v798 = vadd.f32 %v653, %v797
    %v799 = vpop.f32.mrb[0].mxu0
    %v800 = vpop.f32.mrb[0].mxu0
    %v801 = vadd.f32 %v656, %v800
    %v802 = vpop.f32.mrb[0].mxu0
    %803 = vdwg.mxu0
    %v804 = vld [vmem:[%s6] sm:$0x1]
    %v806 = vlaneseq
    %v807 = vshrl.u32 %v806, 7
    %v808 = vsub.s32 0, %v807
    %v809 = vrot.slane %v804, %v808
    %v811 = vadd.f32 %v742, %v809
    %v812 = vadd.f32 %v745, %v809
    %v813 = vadd.f32 %v750, %v809
    %v814 = vadd.f32 %v753, %v809
    %v815 = vadd.f32 %v758, %v809
    %v816 = vadd.f32 %v761, %v809
    %v817 = vadd.f32 %v766, %v809
    %v818 = vadd.f32 %v769, %v809
    %v819 = vadd.f32 %v774, %v809
    %v820 = vadd.f32 %v777, %v809
    %v821 = vadd.f32 %v782, %v809
    %v822 = vadd.f32 %v785, %v809
    %v823 = vadd.f32 %v790, %v809
    %v824 = vadd.f32 %v793, %v809
    %v825 = vadd.f32 %v798, %v809
    %v826 = vadd.f32 %v801, %v809
    %v827 = vmax.f32 %v811, 0.0
    %v828 = vmax.f32 %v812, 0.0
    %v829 = vmax.f32 %v813, 0.0
    %v830 = vmax.f32 %v814, 0.0
    %v831 = vmax.f32 %v815, 0.0
    %v832 = vmax.f32 %v816, 0.0
    %v833 = vmax.f32 %v817, 0.0
    %v834 = vmax.f32 %v818, 0.0
    %v835 = vmax.f32 %v819, 0.0
    %v836 = vmax.f32 %v820, 0.0
    %v837 = vmax.f32 %v821, 0.0
    %v838 = vmax.f32 %v822, 0.0
    %v839 = vmax.f32 %v823, 0.0
    %v840 = vmax.f32 %v824, 0.0
    %v841 = vmax.f32 %v825, 0.0
    %v842 = vmax.f32 %v826, 0.0
    %v843 = vpack.c.bf16 %v828, %v827
    %v844 = vpack.c.bf16 %v830, %v829
    %v845 = vpack.c.bf16 %v832, %v831
    %v846 = vpack.c.bf16 %v834, %v833
    %v847 = vpack.c.bf16 %v836, %v835
    %v848 = vpack.c.bf16 %v838, %v837
    %v849 = vpack.c.bf16 %v840, %v839
    %v850 = vpack.c.bf16 %v842, %v841
    %v851 = vld [vmem:[%s7] sm:$0xf]
    %v852 = vld [vmem:[%s7 + $0x4] sm:$0xf]
    %v853 = vld [vmem:[%s7 + $0x8] sm:$0xf]
    %v854 = vld [vmem:[%s7 + $0xc] sm:$0xf]
    %v855 = vld [vmem:[%s7 + $0x10] sm:$0xf]
    %v856 = vld [vmem:[%s7 + $0x14] sm:$0xf]
    %v857 = vld [vmem:[%s7 + $0x18] sm:$0xf]
    %v858 = vld [vmem:[%s7 + $0x1c] sm:$0xf]
    %v859 = vld [vmem:[%s7 + $0x20] sm:$0xf]
    %v860 = vld [vmem:[%s7 + $0x24] sm:$0xf]
    %v861 = vld [vmem:[%s7 + $0x28] sm:$0xf]
    %v862 = vld [vmem:[%s7 + $0x2c] sm:$0xf]
    %v863 = vld [vmem:[%s7 + $0x30] sm:$0xf]
    %v864 = vld [vmem:[%s7 + $0x34] sm:$0xf]
    %v865 = vld [vmem:[%s7 + $0x38] sm:$0xf]
    %v866 = vld [vmem:[%s7 + $0x3c] sm:$0xf]
    %v883 = vunpack.c.l.b16 %v851
    %v884 = vunpack.c.l.b16 %v852
    %v885 = vunpack.c.l.b16 %v853
    %v886 = vunpack.c.l.b16 %v854
    %v887 = vunpack.c.l.b16 %v855
    %v888 = vunpack.c.l.b16 %v856
    %v889 = vunpack.c.l.b16 %v857
    %v890 = vunpack.c.l.b16 %v858
    %v891 = vunpack.c.l.b16 %v859
    %v892 = vunpack.c.l.b16 %v860
    %v893 = vunpack.c.l.b16 %v861
    %v894 = vunpack.c.l.b16 %v862
    %v895 = vunpack.c.l.b16 %v863
    %v896 = vunpack.c.l.b16 %v864
    %v897 = vunpack.c.l.b16 %v865
    %v898 = vunpack.c.l.b16 %v866
    %v899 = vpack.c.b16 %v884, %v883
    %v900 = vpack.c.b16 %v886, %v885
    %v901 = vpack.c.b16 %v888, %v887
    %v902 = vpack.c.b16 %v890, %v889
    %v903 = vpack.c.b16 %v892, %v891
    %v904 = vpack.c.b16 %v894, %v893
    %v905 = vpack.c.b16 %v896, %v895
    %v906 = vpack.c.b16 %v898, %v897
    %915 = vmatprep.subr.bf16.mxu0 0
    %916 = vmatpush1.bf16.msra.mxu0 %v899
    %917 = vmatprep.subr.bf16.mxu0 0
    %918 = vmatpush1.bf16.msra.mxu0 %v900
    %919 = vmatprep.subr.bf16.mxu0 0
    %920 = vmatpush1.bf16.msra.mxu0 %v901
    %921 = vmatprep.subr.bf16.mxu0 0
    %922 = vmatpush1.bf16.msra.mxu0 %v902
    %923 = vmatprep.subr.bf16.mxu0 0
    %924 = vmatpush1.bf16.msra.mxu0 %v903
    %925 = vmatprep.subr.bf16.mxu0 0
    %926 = vmatpush1.bf16.msra.mxu0 %v904
    %927 = vmatprep.subr.bf16.mxu0 0
    %928 = vmatpush1.bf16.msra.mxu0 %v905
    %929 = vmatprep.subr.bf16.mxu0 0
    %930 = vmatpush1.bf16.msra.mxu0 %v906
    %931 = vmatprep.subr.bf16.mxu0 0
    %932 = vmatpush1.bf16.msra.mxu0 0
    %933 = vmatprep.subr.bf16.mxu0 0
    %934 = vmatpush1.bf16.msra.mxu0 0
    %935 = vmatprep.subr.bf16.mxu0 0
    %936 = vmatpush1.bf16.msra.mxu0 0
    %937 = vmatprep.subr.bf16.mxu0 0
    %938 = vmatpush1.bf16.msra.mxu0 0
    %939 = vmatprep.subr.bf16.mxu0 0
    %940 = vmatpush1.bf16.msra.mxu0 0
    %941 = vmatprep.subr.bf16.mxu0 0
    %942 = vmatpush1.bf16.msra.mxu0 0
    %943 = vmatprep.subr.bf16.mxu0 0
    %944 = vmatpush1.bf16.msra.mxu0 0
    %945 = vmatprep.subr.bf16.mxu0 0
    %946 = vmatpush1.bf16.msra.mxu0 0
    %947 = vmatprep.mubr.bf16.mxu0 0
    %948 = vmatmul.mubr.bf16.gmra.mrb[0].mxu0 %v843
    %v949 = vpop.f32.mrb[0].mxu0
    %v950 = vadd.f32 0.0, %v949
    %v951 = vpop.f32.mrb[0].mxu0
    %v952 = vpop.f32.mrb[0].mxu0
    %v953 = vadd.f32 0.0, %v952
    %v954 = vpop.f32.mrb[0].mxu0
    %955 = vmatprep.mubr.bf16.mxu0 0
    %956 = vmatmul.mubr.bf16.gmra.mrb[0].mxu0 %v844
    %v957 = vpop.f32.mrb[0].mxu0
    %v958 = vadd.f32 0.0, %v957
    %v959 = vpop.f32.mrb[0].mxu0
    %v960 = vpop.f32.mrb[0].mxu0
    %v961 = vadd.f32 0.0, %v960
    %v962 = vpop.f32.mrb[0].mxu0
    %963 = vmatprep.mubr.bf16.mxu0 0
    %964 = vmatmul.mubr.bf16.gmra.mrb[0].mxu0 %v845
    %v965 = vpop.f32.mrb[0].mxu0
    %v966 = vadd.f32 0.0, %v965
    %v967 = vpop.f32.mrb[0].mxu0
    %v968 = vpop.f32.mrb[0].mxu0
    %v969 = vadd.f32 0.0, %v968
    %v970 = vpop.f32.mrb[0].mxu0
    %971 = vmatprep.mubr.bf16.mxu0 0
    %972 = vmatmul.mubr.bf16.gmra.mrb[0].mxu0 %v846
    %v973 = vpop.f32.mrb[0].mxu0
    %v974 = vadd.f32 0.0, %v973
    %v975 = vpop.f32.mrb[0].mxu0
    %v976 = vpop.f32.mrb[0].mxu0
    %v977 = vadd.f32 0.0, %v976
    %v978 = vpop.f32.mrb[0].mxu0
    %979 = vmatprep.mubr.bf16.mxu0 0
    %980 = vmatmul.mubr.bf16.gmra.mrb[0].mxu0 %v847
    %v981 = vpop.f32.mrb[0].mxu0
    %v982 = vadd.f32 0.0, %v981
    %v983 = vpop.f32.mrb[0].mxu0
    %v984 = vpop.f32.mrb[0].mxu0
    %v985 = vadd.f32 0.0, %v984
    %v986 = vpop.f32.mrb[0].mxu0
    %987 = vmatprep.mubr.bf16.mxu0 0
    %988 = vmatmul.mubr.bf16.gmra.mrb[0].mxu0 %v848
    %v989 = vpop.f32.mrb[0].mxu0
    %v990 = vadd.f32 0.0, %v989
    %v991 = vpop.f32.mrb[0].mxu0
    %v992 = vpop.f32.mrb[0].mxu0
    %v993 = vadd.f32 0.0, %v992
    %v994 = vpop.f32.mrb[0].mxu0
    %995 = vmatprep.mubr.bf16.mxu0 0
    %996 = vmatmul.mubr.bf16.gmra.mrb[0].mxu0 %v849
    %v997 = vpop.f32.mrb[0].mxu0
    %v998 = vadd.f32 0.0, %v997
    %v999 = vpop.f32.mrb[0].mxu0
    %v1000 = vpop.f32.mrb[0].mxu0
    %v1001 = vadd.f32 0.0, %v1000
    %v1002 = vpop.f32.mrb[0].mxu0
    %1003 = vmatprep.mubr.bf16.mxu0 0
    %1004 = vmatmul.mubr.bf16.gmra.mrb[0].mxu0 %v850
    %v1005 = vpop.f32.mrb[0].mxu0
    %v1006 = vadd.f32 0.0, %v1005
    %v1007 = vpop.f32.mrb[0].mxu0
    %v1008 = vpop.f32.mrb[0].mxu0
    %v1009 = vadd.f32 0.0, %v1008
    %v1010 = vpop.f32.mrb[0].mxu0
    %1011 = vdwg.mxu0
    %v1012 = vpack.c.bf16 %v953, %v950
    %v1013 = vpack.c.bf16 %v961, %v958
    %v1014 = vpack.c.bf16 %v969, %v966
    %v1015 = vpack.c.bf16 %v977, %v974
    %v1016 = vpack.c.bf16 %v985, %v982
    %v1017 = vpack.c.bf16 %v993, %v990
    %v1018 = vpack.c.bf16 %v1001, %v998
    %v1019 = vpack.c.bf16 %v1009, %v1006
    %v1028 = vunpack.c.l.b16 %v1012
    %v1029 = vunpack.c.h.b16 %v1012
    %v1030 = vunpack.c.l.b16 %v1013
    %v1031 = vunpack.c.h.b16 %v1013
    %v1032 = vunpack.c.l.b16 %v1014
    %v1033 = vunpack.c.h.b16 %v1014
    %v1034 = vunpack.c.l.b16 %v1015
    %v1035 = vunpack.c.h.b16 %v1015
    %v1036 = vunpack.c.l.b16 %v1016
    %v1037 = vunpack.c.h.b16 %v1016
    %v1038 = vunpack.c.l.b16 %v1017
    %v1039 = vunpack.c.h.b16 %v1017
    %v1040 = vunpack.c.l.b16 %v1018
    %v1041 = vunpack.c.h.b16 %v1018
    %v1042 = vunpack.c.l.b16 %v1019
    %v1043 = vunpack.c.h.b16 %v1019
    %v1044 = vpack.c.b16 %v1028, %v1028
    %v1045 = vpack.c.b16 %v1029, %v1029
    %v1046 = vpack.c.b16 %v1030, %v1030
    %v1047 = vpack.c.b16 %v1031, %v1031
    %v1048 = vpack.c.b16 %v1032, %v1032
    %v1049 = vpack.c.b16 %v1033, %v1033
    %v1050 = vpack.c.b16 %v1034, %v1034
    %v1051 = vpack.c.b16 %v1035, %v1035
    %v1052 = vpack.c.b16 %v1036, %v1036
    %v1053 = vpack.c.b16 %v1037, %v1037
    %v1054 = vpack.c.b16 %v1038, %v1038
    %v1055 = vpack.c.b16 %v1039, %v1039
    %v1056 = vpack.c.b16 %v1040, %v1040
    %v1057 = vpack.c.b16 %v1041, %v1041
    %v1058 = vpack.c.b16 %v1042, %v1042
    %v1059 = vpack.c.b16 %v1043, %v1043
    %1076 = vst [vmem:[%s10] sm:$0xf] %v1044
    %1077 = vst [vmem:[%s10 + $0x4] sm:$0xf] %v1045
    %1078 = vst [vmem:[%s10 + $0x8] sm:$0xf] %v1046
    %1079 = vst [vmem:[%s10 + $0xc] sm:$0xf] %v1047
    %1080 = vst [vmem:[%s10 + $0x10] sm:$0xf] %v1048
    %1081 = vst [vmem:[%s10 + $0x14] sm:$0xf] %v1049
    %1082 = vst [vmem:[%s10 + $0x18] sm:$0xf] %v1050
    %1083 = vst [vmem:[%s10 + $0x1c] sm:$0xf] %v1051
    %1084 = vst [vmem:[%s10 + $0x20] sm:$0xf] %v1052
    %1085 = vst [vmem:[%s10 + $0x24] sm:$0xf] %v1053
    %1086 = vst [vmem:[%s10 + $0x28] sm:$0xf] %v1054
    %1087 = vst [vmem:[%s10 + $0x2c] sm:$0xf] %v1055
    %1088 = vst [vmem:[%s10 + $0x30] sm:$0xf] %v1056
    %1089 = vst [vmem:[%s10 + $0x34] sm:$0xf] %v1057
    %1090 = vst [vmem:[%s10 + $0x38] sm:$0xf] %v1058
    %1091 = vst [vmem:[%s10 + $0x3c] sm:$0xf] %v1059
    %v1092 = vld [vmem:[%s8] sm:$0xf]
    %v1093 = vld [vmem:[%s8 + $0x4] sm:$0xf]
    %v1094 = vld [vmem:[%s8 + $0x8] sm:$0xf]
    %v1095 = vld [vmem:[%s8 + $0xc] sm:$0xf]
    %v1096 = vld [vmem:[%s8 + $0x10] sm:$0xf]
    %v1097 = vld [vmem:[%s8 + $0x14] sm:$0xf]
    %v1098 = vld [vmem:[%s8 + $0x18] sm:$0xf]
    %v1099 = vld [vmem:[%s8 + $0x1c] sm:$0xf]
    %v1100 = vld [vmem:[%s8 + $0x20] sm:$0xf]
    %v1101 = vld [vmem:[%s8 + $0x24] sm:$0xf]
    %v1102 = vld [vmem:[%s8 + $0x28] sm:$0xf]
    %v1103 = vld [vmem:[%s8 + $0x2c] sm:$0xf]
    %v1104 = vld [vmem:[%s8 + $0x30] sm:$0xf]
    %v1105 = vld [vmem:[%s8 + $0x34] sm:$0xf]
    %v1106 = vld [vmem:[%s8 + $0x38] sm:$0xf]
    %v1107 = vld [vmem:[%s8 + $0x3c] sm:$0xf]
    %v1108 = vld [vmem:[%s9] sm:$0x1]
    %v1110 = vlaneseq
    %v1111 = vshrl.u32 %v1110, 7
    %v1112 = vsub.s32 0, %v1111
    %v1113 = vrot.slane %v1108, %v1112
    %v1131 = vunpack.c.l.b16 %v1092
    %v1132 = vunpack.c.l.b16 %v1093
    %v1133 = vunpack.c.l.b16 %v1094
    %v1134 = vunpack.c.l.b16 %v1095
    %v1135 = vunpack.c.l.b16 %v1096
    %v1136 = vunpack.c.l.b16 %v1097
    %v1137 = vunpack.c.l.b16 %v1098
    %v1138 = vunpack.c.l.b16 %v1099
    %v1139 = vunpack.c.l.b16 %v1100
    %v1140 = vunpack.c.l.b16 %v1101
    %v1141 = vunpack.c.l.b16 %v1102
    %v1142 = vunpack.c.l.b16 %v1103
    %v1143 = vunpack.c.l.b16 %v1104
    %v1144 = vunpack.c.l.b16 %v1105
    %v1145 = vunpack.c.l.b16 %v1106
    %v1146 = vunpack.c.l.b16 %v1107
    %v1147 = vpack.c.b16 %v1132, %v1131
    %v1148 = vpack.c.b16 %v1134, %v1133
    %v1149 = vpack.c.b16 %v1136, %v1135
    %v1150 = vpack.c.b16 %v1138, %v1137
    %v1151 = vpack.c.b16 %v1140, %v1139
    %v1152 = vpack.c.b16 %v1142, %v1141
    %v1153 = vpack.c.b16 %v1144, %v1143
    %v1154 = vpack.c.b16 %v1146, %v1145
    %1163 = vmatprep.subr.bf16.mxu0 0
    %1164 = vmatpush1.bf16.msra.mxu0 %v1147
    %1165 = vmatprep.subr.bf16.mxu0 0
    %1166 = vmatpush1.bf16.msra.mxu0 %v1148
    %1167 = vmatprep.subr.bf16.mxu0 0
    %1168 = vmatpush1.bf16.msra.mxu0 %v1149
    %1169 = vmatprep.subr.bf16.mxu0 0
    %1170 = vmatpush1.bf16.msra.mxu0 %v1150
    %1171 = vmatprep.subr.bf16.mxu0 0
    %1172 = vmatpush1.bf16.msra.mxu0 %v1151
    %1173 = vmatprep.subr.bf16.mxu0 0
    %1174 = vmatpush1.bf16.msra.mxu0 %v1152
    %1175 = vmatprep.subr.bf16.mxu0 0
    %1176 = vmatpush1.bf16.msra.mxu0 %v1153
    %1177 = vmatprep.subr.bf16.mxu0 0
    %1178 = vmatpush1.bf16.msra.mxu0 %v1154
    %1179 = vmatprep.subr.bf16.mxu0 0
    %1180 = vmatpush1.bf16.msra.mxu0 0
    %1181 = vmatprep.subr.bf16.mxu0 0
    %1182 = vmatpush1.bf16.msra.mxu0 0
    %1183 = vmatprep.subr.bf16.mxu0 0
    %1184 = vmatpush1.bf16.msra.mxu0 0
    %1185 = vmatprep.subr.bf16.mxu0 0
    %1186 = vmatpush1.bf16.msra.mxu0 0
    %1187 = vmatprep.subr.bf16.mxu0 0
    %1188 = vmatpush1.bf16.msra.mxu0 0
    %1189 = vmatprep.subr.bf16.mxu0 0
    %1190 = vmatpush1.bf16.msra.mxu0 0
    %1191 = vmatprep.subr.bf16.mxu0 0
    %1192 = vmatpush1.bf16.msra.mxu0 0
    %1193 = vmatprep.subr.bf16.mxu0 0
    %1194 = vmatpush1.bf16.msra.mxu0 0
    %1195 = vmatprep.mubr.bf16.mxu0 0
    %1196 = vmatmul.mubr.bf16.gmra.mrb[0].mxu0 %v843
    %v1197 = vpop.f32.mrb[0].mxu0
    %v1198 = vadd.f32 %v1113, %v1197
    %v1199 = vpop.f32.mrb[0].mxu0
    %v1200 = vpop.f32.mrb[0].mxu0
    %v1201 = vadd.f32 %v1113, %v1200
    %v1202 = vpop.f32.mrb[0].mxu0
    %1203 = vmatprep.mubr.bf16.mxu0 0
    %1204 = vmatmul.mubr.bf16.gmra.mrb[0].mxu0 %v844
    %v1205 = vpop.f32.mrb[0].mxu0
    %v1206 = vadd.f32 %v1113, %v1205
    %v1207 = vpop.f32.mrb[0].mxu0
    %v1208 = vpop.f32.mrb[0].mxu0
    %v1209 = vadd.f32 %v1113, %v1208
    %v1210 = vpop.f32.mrb[0].mxu0
    %1211 = vmatprep.mubr.bf16.mxu0 0
    %1212 = vmatmul.mubr.bf16.gmra.mrb[0].mxu0 %v845
    %v1213 = vpop.f32.mrb[0].mxu0
    %v1214 = vadd.f32 %v1113, %v1213
    %v1215 = vpop.f32.mrb[0].mxu0
    %v1216 = vpop.f32.mrb[0].mxu0
    %v1217 = vadd.f32 %v1113, %v1216
    %v1218 = vpop.f32.mrb[0].mxu0
    %1219 = vmatprep.mubr.bf16.mxu0 0
    %1220 = vmatmul.mubr.bf16.gmra.mrb[0].mxu0 %v846
    %v1221 = vpop.f32.mrb[0].mxu0
    %v1222 = vadd.f32 %v1113, %v1221
    %v1223 = vpop.f32.mrb[0].mxu0
    %v1224 = vpop.f32.mrb[0].mxu0
    %v1225 = vadd.f32 %v1113, %v1224
    %v1226 = vpop.f32.mrb[0].mxu0
    %1227 = vmatprep.mubr.bf16.mxu0 0
    %1228 = vmatmul.mubr.bf16.gmra.mrb[0].mxu0 %v847
    %v1229 = vpop.f32.mrb[0].mxu0
    %v1230 = vadd.f32 %v1113, %v1229
    %v1231 = vpop.f32.mrb[0].mxu0
    %v1232 = vpop.f32.mrb[0].mxu0
    %v1233 = vadd.f32 %v1113, %v1232
    %v1234 = vpop.f32.mrb[0].mxu0
    %1235 = vmatprep.mubr.bf16.mxu0 0
    %1236 = vmatmul.mubr.bf16.gmra.mrb[0].mxu0 %v848
    %v1237 = vpop.f32.mrb[0].mxu0
    %v1238 = vadd.f32 %v1113, %v1237
    %v1239 = vpop.f32.mrb[0].mxu0
    %v1240 = vpop.f32.mrb[0].mxu0
    %v1241 = vadd.f32 %v1113, %v1240
    %v1242 = vpop.f32.mrb[0].mxu0
    %1243 = vmatprep.mubr.bf16.mxu0 0
    %1244 = vmatmul.mubr.bf16.gmra.mrb[0].mxu0 %v849
    %v1245 = vpop.f32.mrb[0].mxu0
    %v1246 = vadd.f32 %v1113, %v1245
    %v1247 = vpop.f32.mrb[0].mxu0
    %v1248 = vpop.f32.mrb[0].mxu0
    %v1249 = vadd.f32 %v1113, %v1248
    %v1250 = vpop.f32.mrb[0].mxu0
    %1251 = vmatprep.mubr.bf16.mxu0 0
    %1252 = vmatmul.mubr.bf16.gmra.mrb[0].mxu0 %v850
    %v1253 = vpop.f32.mrb[0].mxu0
    %v1254 = vadd.f32 %v1113, %v1253
    %v1255 = vpop.f32.mrb[0].mxu0
    %v1256 = vpop.f32.mrb[0].mxu0
    %v1257 = vadd.f32 %v1113, %v1256
    %v1258 = vpop.f32.mrb[0].mxu0
    %1259 = vdwg.mxu0
    %v1260 = vpack.c.bf16 %v1201, %v1198
    %v1261 = vpack.c.bf16 %v1209, %v1206
    %v1262 = vpack.c.bf16 %v1217, %v1214
    %v1263 = vpack.c.bf16 %v1225, %v1222
    %v1264 = vpack.c.bf16 %v1233, %v1230
    %v1265 = vpack.c.bf16 %v1241, %v1238
    %v1266 = vpack.c.bf16 %v1249, %v1246
    %v1267 = vpack.c.bf16 %v1257, %v1254
    %v1276 = vunpack.c.l.b16 %v1260
    %v1277 = vunpack.c.h.b16 %v1260
    %v1278 = vunpack.c.l.b16 %v1261
    %v1279 = vunpack.c.h.b16 %v1261
    %v1280 = vunpack.c.l.b16 %v1262
    %v1281 = vunpack.c.h.b16 %v1262
    %v1282 = vunpack.c.l.b16 %v1263
    %v1283 = vunpack.c.h.b16 %v1263
    %v1284 = vunpack.c.l.b16 %v1264
    %v1285 = vunpack.c.h.b16 %v1264
    %v1286 = vunpack.c.l.b16 %v1265
    %v1287 = vunpack.c.h.b16 %v1265
    %v1288 = vunpack.c.l.b16 %v1266
    %v1289 = vunpack.c.h.b16 %v1266
    %v1290 = vunpack.c.l.b16 %v1267
    %v1291 = vunpack.c.h.b16 %v1267
    %v1292 = vpack.c.b16 %v1276, %v1276
    %v1293 = vpack.c.b16 %v1277, %v1277
    %v1294 = vpack.c.b16 %v1278, %v1278
    %v1295 = vpack.c.b16 %v1279, %v1279
    %v1296 = vpack.c.b16 %v1280, %v1280
    %v1297 = vpack.c.b16 %v1281, %v1281
    %v1298 = vpack.c.b16 %v1282, %v1282
    %v1299 = vpack.c.b16 %v1283, %v1283
    %v1300 = vpack.c.b16 %v1284, %v1284
    %v1301 = vpack.c.b16 %v1285, %v1285
    %v1302 = vpack.c.b16 %v1286, %v1286
    %v1303 = vpack.c.b16 %v1287, %v1287
    %v1304 = vpack.c.b16 %v1288, %v1288
    %v1305 = vpack.c.b16 %v1289, %v1289
    %v1306 = vpack.c.b16 %v1290, %v1290
    %v1307 = vpack.c.b16 %v1291, %v1291
    %1324 = vst [vmem:[%s11] sm:$0xf] %v1292
    %1325 = vst [vmem:[%s11 + $0x4] sm:$0xf] %v1293
    %1326 = vst [vmem:[%s11 + $0x8] sm:$0xf] %v1294
    %1327 = vst [vmem:[%s11 + $0xc] sm:$0xf] %v1295
    %1328 = vst [vmem:[%s11 + $0x10] sm:$0xf] %v1296
    %1329 = vst [vmem:[%s11 + $0x14] sm:$0xf] %v1297
    %1330 = vst [vmem:[%s11 + $0x18] sm:$0xf] %v1298
    %1331 = vst [vmem:[%s11 + $0x1c] sm:$0xf] %v1299
    %1332 = vst [vmem:[%s11 + $0x20] sm:$0xf] %v1300
    %1333 = vst [vmem:[%s11 + $0x24] sm:$0xf] %v1301
    %1334 = vst [vmem:[%s11 + $0x28] sm:$0xf] %v1302
    %1335 = vst [vmem:[%s11 + $0x2c] sm:$0xf] %v1303
    %1336 = vst [vmem:[%s11 + $0x30] sm:$0xf] %v1304
    %1337 = vst [vmem:[%s11 + $0x34] sm:$0xf] %v1305
    %1338 = vst [vmem:[%s11 + $0x38] sm:$0xf] %v1306
    %1339 = vst [vmem:[%s11 + $0x3c] sm:$0xf] %v1307
  $region49: #{graphsage_link_predictor.3} parent=0 // pred_fallthru
    _
  // Predicated region
  $region50: #{graphsage_link_predictor.3} parent=0 // pred_check
    _
  $region51: #{graphsage_link_predictor.3} parent=0 // pred_check_branch
    %1341 = sbr.rel (0) target = $region53
  $region52: #{graphsage_link_predictor.3} parent=0 // pred_region
    _
  $region53: #{graphsage_link_predictor.3} parent=0 // pred_fallthru
    _
  // Predicated region
  $region54: #{graphsage_link_predictor.3} parent=0 // pred_check
    _
  $region55: #{graphsage_link_predictor.3} parent=0 // pred_check_branch
    %1343 = sbr.rel (0) target = $region57
  $region56: #{graphsage_link_predictor.3} parent=0 // pred_region
    _
  $region57: #{graphsage_link_predictor.3} parent=0 // pred_fallthru
    _
  // Predicated region
  $region58: #{graphsage_link_predictor.3} parent=0 // pred_check
    _
  $region59: #{graphsage_link_predictor.3} parent=0 // pred_check_branch
    %1345 = sbr.rel (0) target = $region61
  $region60: #{graphsage_link_predictor.3} parent=0 // pred_region
    _
  $region61: #{graphsage_link_predictor.3} parent=0 // pred_fallthru
    _
  // Predicated region
  $region62: #{graphsage_link_predictor.3} parent=0 // pred_check
    _
  $region63: #{graphsage_link_predictor.3} parent=0 // pred_check_branch
    %1347 = sbr.rel (0) target = $region65
  $region64: #{graphsage_link_predictor.3} parent=0 // pred_region
    _
  $region65: #{graphsage_link_predictor.3} parent=0 // pred_fallthru
    _

</llo_original>
